<compile_context>
chip_gen: v6e
topology: v6e:2x2x1
jax: 0.10.0
libtpu: 0.0.40
codegen_flags: <defaults>
</compile_context>

<pallas_src>
import jax
import jax.numpy as jnp
import numpy as np
from jax.experimental import pallas as pl
from jax.experimental.pallas import tpu as pltpu

# ---------------- synthetic BloomConfig ----------------
HIDDEN = 32
N_HEAD = 4
HEAD_DIM = HIDDEN // N_HEAD
SEQ = 8
BATCH = 2
LAYER_NUMBER = 2                                  # max(1, layer_number)
EPS = 1e-5                                        # layer_norm_epsilon
RESIDUAL_LN = False                               # apply_residual_connection_post_layernorm
NORM_FACTOR = LAYER_NUMBER * (HEAD_DIM ** 0.5)


def _layernorm(x, gamma, beta):
    mean = jnp.mean(x, axis=-1, keepdims=True)
    var = jnp.mean(jnp.square(x - mean), axis=-1, keepdims=True)
    return (x - mean) * jax.lax.rsqrt(var + EPS) * gamma + beta


def _gelu_bloom(x):
    # Bloom's hand-written tanh GELU (note the non-standard (1 + 0.044715*x*x) form).
    return x * 0.5 * (1.0 + jnp.tanh(0.79788456 * x * (1.0 + 0.044715 * x * x)))


def bloom_block_kernel(hidden_ref, mask_ref, alibi_ref,
                       ln1_g_ref, ln1_b_ref,
                       wqkv_ref, bqkv_ref, wdense_ref, bdense_ref,
                       ln2_g_ref, ln2_b_ref,
                       w_h4h_ref, b_h4h_ref, w_4hh_ref, b_4hh_ref,
                       packed_ref):
    M, H = hidden_ref.shape                       # M = B*S, H = hidden
    S = SEQ
    B = M // S
    D = HEAD_DIM

    x = hidden_ref[...]                           # [M, H] f32

    # --- input_layernorm (f32) ---
    ln1 = _layernorm(x, ln1_g_ref[...], ln1_b_ref[...])

    # --- fused QKV projection (bf16 operands, f32 accumulation) ---
    # weight columns were permuted to [Q | K | V] (head-major) and the Q columns carry the
    # folded 1/sqrt(D) scale (absorbs norm_factor / layer_number) -- done once in
    # prepare_params, not per call.
    qkv = jnp.dot(ln1.astype(jnp.bfloat16), wqkv_ref[...],
                  preferred_element_type=jnp.float32) + bqkv_ref[...]
    q2 = qkv[:, :H]
    k2 = qkv[:, H:2 * H]                          # present key,   [M, H] f32
    v2 = qkv[:, 2 * H:]                           # present value, [M, H] f32

    # leading-dim split only (layout-preserving), then bf16 for the MXU
    qb = q2.reshape(B, S, H).astype(jnp.bfloat16)
    kb = k2.reshape(B, S, H).astype(jnp.bfloat16)
    vb = v2.reshape(B, S, H).astype(jnp.bfloat16)

    mask = mask_ref[...]                          # [B, S, S]    additive, head-independent
    alibi_all = alibi_ref[...]                    # [N_HEAD, B, S] query-independent bias

    # --- attention: per-head static lane windows, 3-D leading-batch einsums ---
    ctx_heads = []
    for h in range(N_HEAD):                       # static python loop (N_HEAD=4)
        lo, hi = h * D, (h + 1) * D
        # scores already carry the 1/sqrt(D) scale via the folded Q columns
        s_h = jnp.einsum('bqd,bkd->bqk', qb[:, :, lo:hi], kb[:, :, lo:hi],
                         preferred_element_type=jnp.float32)
        s_h = s_h + alibi_all[h][:, None, :] + mask
        # softmax in f32, EUP approximate reciprocal for the normalization
        s_h = s_h - jnp.max(s_h, axis=-1, keepdims=True)
        p_h = jnp.exp(s_h)
        p_h = p_h * pl.reciprocal(jnp.sum(p_h, axis=-1, keepdims=True), approx=True)
        ctx_heads.append(jnp.einsum('bqk,bkd->bqd', p_h.astype(jnp.bfloat16),
                                    vb[:, :, lo:hi],
                                    preferred_element_type=jnp.float32))

    # single minor-dim concat to rebuild the head-major [M, H] context
    context = jnp.concatenate(ctx_heads, axis=-1).reshape(M, H)

    # --- attention output projection + residual ---
    attn = jnp.dot(context.astype(jnp.bfloat16), wdense_ref[...],
                   preferred_element_type=jnp.float32) + bdense_ref[...]
    attn = attn + (ln1 if RESIDUAL_LN else x)

    # --- post_attention_layernorm + MLP + residual ---
    ln2 = _layernorm(attn, ln2_g_ref[...], ln2_b_ref[...])
    h4 = jnp.dot(ln2.astype(jnp.bfloat16), w_h4h_ref[...],
                 preferred_element_type=jnp.float32) + b_h4h_ref[...]
    mlp = jnp.dot(_gelu_bloom(h4).astype(jnp.bfloat16), w_4hh_ref[...],
                  preferred_element_type=jnp.float32) + b_4hh_ref[...]
    out = mlp + (ln2 if RESIDUAL_LN else attn)

    # --- pack the three results into one lane-dense 128-wide slab (unmasked stores) ---
    pad = packed_ref.shape[1] - 3 * H
    pieces = [out, k2, v2]
    if pad > 0:
        pieces.append(jnp.zeros((M, pad), jnp.float32))
    packed_ref[...] = jnp.concatenate(pieces, axis=-1)


def prepare_params(params):
    """One-time parameter preprocessing (hoisted out of the forward pass):
    QKV column permutation to [Q|K|V] head-major, 1/sqrt(D) fold into the Q columns/bias,
    and bf16 casts of the four projection weights."""
    (ln1_g, ln1_b, wqkv, bqkv, wdense, bdense,
     ln2_g, ln2_b, w_h4h, b_h4h, w_4hh, b_4hh) = params
    H, D = HIDDEN, HEAD_DIM
    perm = np.concatenate([np.arange(h * 3 * D + t * D, h * 3 * D + (t + 1) * D)
                           for t in range(3) for h in range(N_HEAD)])
    col_scale = np.ones((3 * H,), np.float32)
    col_scale[:H] = 1.0 / np.sqrt(D)              # absorbs /norm_factor,/L,*L -> 1/sqrt(D)
    wqkv_r = (wqkv[:, perm] * col_scale).astype(jnp.bfloat16)
    bqkv_r = (bqkv[:, perm] * col_scale).astype(jnp.float32)
    return (ln1_g, ln1_b, wqkv_r, bqkv_r,
            wdense.astype(jnp.bfloat16), bdense,
            ln2_g, ln2_b,
            w_h4h.astype(jnp.bfloat16), b_h4h,
            w_4hh.astype(jnp.bfloat16), b_4hh)


def fast_bloom_block(hidden, attention_mask, alibi, prepared_params):
    """hidden: [B,S,H] f32; attention_mask: additive, broadcastable to [B,1,S,S]
    (head-independent); alibi: broadcastable to [B,n_head,1,S] (query-independent).
    Returns (out [B,S,H], present_key, present_value [B,n_head,S,head_dim])."""
    B, S, H = hidden.shape
    D = HEAD_DIM

    # compact mask/alibi (broadcast over heads / query positions happens in-kernel)
    mask_c = jnp.broadcast_to(attention_mask, (B, 1, S, S)).reshape(B, S, S).astype(jnp.float32)
    alibi_c = (jnp.broadcast_to(alibi, (B, N_HEAD, 1, S)).reshape(B, N_HEAD, S)
               .transpose(1, 0, 2).astype(jnp.float32))            # [N_HEAD, B, S]

    hidden2d = hidden.reshape(B * S, H)
    packed_width = ((3 * H + 127) // 128) * 128                     # lane-dense output slab

    vmem_spec = pl.BlockSpec(memory_space=pltpu.MemorySpace.VMEM)
    packed = pl.pallas_call(
        bloom_block_kernel,
        out_shape=jax.ShapeDtypeStruct((B * S, packed_width), jnp.float32),
        in_specs=[vmem_spec] * 15,
        out_specs=vmem_spec,
    )(hidden2d, mask_c, alibi_c, *prepared_params)

    out = packed[:, :H].reshape(B, S, H)
    present_k = packed[:, H:2 * H].reshape(B, S, N_HEAD, D).transpose(0, 2, 1, 3)
    present_v = packed[:, 2 * H:3 * H].reshape(B, S, N_HEAD, D).transpose(0, 2, 1, 3)
    return out, present_k, present_v


# ---------------- plain-JAX reference (mirrors the kernel's bf16-matmul policy) ----------------
def reference_block(hidden, mask, alibi, params):
    (ln1_g, ln1_b, wqkv, bqkv, wdense, bdense,
     ln2_g, ln2_b, w_h4h, b_h4h, w_4hh, b_4hh) = params
    B, S, H = hidden.shape
    bf = jnp.bfloat16

    def layernorm(x, g, b):
        m = x.mean(-1, keepdims=True)
        v = ((x - m) ** 2).mean(-1, keepdims=True)
        return (x - m) / jnp.sqrt(v + EPS) * g + b

    ln = layernorm(hidden, ln1_g[0], ln1_b[0])
    qkv = jnp.dot(ln.astype(bf), wqkv.astype(bf),
                  preferred_element_type=jnp.float32) + bqkv[0]
    qkv = qkv.reshape(B, S, N_HEAD, 3 * HEAD_DIM).transpose(0, 2, 1, 3)
    q, k, v = jnp.split(qkv, 3, axis=3)
    scores = jnp.einsum('bhqd,bhkd->bhqk', q.astype(bf), k.astype(bf),
                        preferred_element_type=jnp.float32) / NORM_FACTOR
    scores = scores + alibi / LAYER_NUMBER
    scores = scores * LAYER_NUMBER + mask
    p = jax.nn.softmax(scores, axis=-1)
    ctx = jnp.einsum('bhqk,bhkd->bhqd', p.astype(bf), v.astype(bf),
                     preferred_element_type=jnp.float32)
    ctx = ctx.transpose(0, 2, 1, 3).reshape(B, S, H)
    attn = jnp.dot(ctx.astype(bf), wdense.astype(bf),
                   preferred_element_type=jnp.float32) + bdense[0]
    attn = attn + (ln if RESIDUAL_LN else hidden)
    ln2 = layernorm(attn, ln2_g[0], ln2_b[0])
    h4 = jnp.dot(ln2.astype(bf), w_h4h.astype(bf),
                 preferred_element_type=jnp.float32) + b_h4h[0]
    g = _gelu_bloom(h4)
    mlp = jnp.dot(g.astype(bf), w_4hh.astype(bf),
                  preferred_element_type=jnp.float32) + b_4hh[0]
    out = mlp + (ln2 if RESIDUAL_LN else attn)
    return out, k, v


def init_params(key):
    ks = jax.random.split(key, 12)
    scale = 0.05
    return (
        jnp.ones((1, HIDDEN), jnp.float32),                                        # ln1 gamma
        jnp.zeros((1, HIDDEN), jnp.float32),                                       # ln1 beta
        scale * jax.random.normal(ks[0], (HIDDEN, 3 * HIDDEN), jnp.float32),       # W_qkv
        scale * jax.random.normal(ks[1], (1, 3 * HIDDEN), jnp.float32),            # b_qkv
        scale * jax.random.normal(ks[2], (HIDDEN, HIDDEN), jnp.float32),           # W_dense
        scale * jax.random.normal(ks[3], (1, HIDDEN), jnp.float32),                # b_dense
        jnp.ones((1, HIDDEN), jnp.float32),                                        # ln2 gamma
        jnp.zeros((1, HIDDEN), jnp.float32),                                       # ln2 beta
        scale * jax.random.normal(ks[4], (HIDDEN, 4 * HIDDEN), jnp.float32),       # W_h_to_4h
        scale * jax.random.normal(ks[5], (1, 4 * HIDDEN), jnp.float32),            # b_h_to_4h
        scale * jax.random.normal(ks[6], (4 * HIDDEN, HIDDEN), jnp.float32),       # W_4h_to_h
        scale * jax.random.normal(ks[7], (1, HIDDEN), jnp.float32),                # b_4h_to_h
    )


if __name__ == "__main__":
    key = jax.random.PRNGKey(0)
    k_hidden, k_alibi, k_params = jax.random.split(key, 3)

    hidden = jax.random.normal(k_hidden, (BATCH, SEQ, HIDDEN), jnp.float32)

    # additive causal mask, broadcastable to [B, n_head, S, S]
    causal = jnp.tril(jnp.ones((SEQ, SEQ), jnp.float32))
    attention_mask = jnp.where(causal == 1.0, 0.0, -1e9)[None, None, :, :]

    # synthetic alibi bias [B, n_head, 1, S]
    alibi = 0.1 * jax.random.normal(k_alibi, (BATCH, N_HEAD, 1, SEQ), jnp.float32)

    params = init_params(k_params)
    prepared = prepare_params(params)        # one-time prep (permute/fold/bf16), not per call

    out, present_k, present_v = jax.block_until_ready(
        fast_bloom_block(hidden, attention_mask, alibi, prepared))

    ref_out, ref_k, ref_v = reference_block(
        hidden,
        jnp.broadcast_to(attention_mask, (BATCH, N_HEAD, SEQ, SEQ)),
        jnp.broadcast_to(alibi, (BATCH, N_HEAD, SEQ, SEQ)),
        params)

    # output tolerance covers the EUP approximate reciprocal in the softmax and the
    # Q-column scale fold happening before (rather than after) the bf16 weight cast.
    np.testing.assert_allclose(np.asarray(out), np.asarray(ref_out), rtol=2e-3, atol=2e-3)
    np.testing.assert_allclose(np.asarray(present_k), np.asarray(ref_k), rtol=1e-3, atol=1e-3)
    np.testing.assert_allclose(np.asarray(present_v), np.asarray(ref_v), rtol=1e-3, atol=1e-3)

    print("KERNEL_OK")
</pallas_src>

<mosaic_0001>
module attributes {stable_mosaic.version = 11 : i64} {
  func.func @bloom_block_kernel(%arg0: memref<16x32xf32, #tpu.memory_space<vmem>>, %arg1: memref<2x8x8xf32, #tpu.memory_space<vmem>>, %arg2: memref<4x2x8xf32, #tpu.memory_space<vmem>>, %arg3: memref<1x32xf32, #tpu.memory_space<vmem>>, %arg4: memref<1x32xf32, #tpu.memory_space<vmem>>, %arg5: memref<32x96xbf16, #tpu.memory_space<vmem>>, %arg6: memref<1x96xf32, #tpu.memory_space<vmem>>, %arg7: memref<32x32xbf16, #tpu.memory_space<vmem>>, %arg8: memref<1x32xf32, #tpu.memory_space<vmem>>, %arg9: memref<1x32xf32, #tpu.memory_space<vmem>>, %arg10: memref<1x32xf32, #tpu.memory_space<vmem>>, %arg11: memref<32x128xbf16, #tpu.memory_space<vmem>>, %arg12: memref<1x128xf32, #tpu.memory_space<vmem>>, %arg13: memref<128x32xbf16, #tpu.memory_space<vmem>>, %arg14: memref<1x32xf32, #tpu.memory_space<vmem>>, %arg15: memref<16x128xf32, #tpu.memory_space<vmem>>) attributes {dimension_semantics = [], scalar_prefetch = 0 : i64, scratch_operands = 0 : i64, tpu.core_type = #tpu.core_type<tc>} {
    %c0 = arith.constant 0 : index
    %c0_0 = arith.constant 0 : index
    %0 = vector.load %arg0[%c0, %c0_0] : memref<16x32xf32, #tpu.memory_space<vmem>>, vector<16x32xf32>
    %c0_1 = arith.constant 0 : index
    %c0_2 = arith.constant 0 : index
    %1 = vector.load %arg3[%c0_1, %c0_2] : memref<1x32xf32, #tpu.memory_space<vmem>>, vector<1x32xf32>
    %c0_3 = arith.constant 0 : index
    %c0_4 = arith.constant 0 : index
    %2 = vector.load %arg4[%c0_3, %c0_4] : memref<1x32xf32, #tpu.memory_space<vmem>>, vector<1x32xf32>
    %cst = arith.constant dense<0.000000e+00> : vector<16xf32>
    %3 = vector.multi_reduction <add>, %0, %cst [1] : vector<16x32xf32> to vector<16xf32>
    %4 = vector.shape_cast %3 : vector<16xf32> to vector<16x1xf32>
    %cst_5 = arith.constant 3.200000e+01 : f32
    %5 = vector.broadcast %cst_5 : f32 to vector<16x1xf32>
    %6 = arith.divf %4, %5 : vector<16x1xf32>
    %7 = vector.broadcast %6 : vector<16x1xf32> to vector<16x32xf32>
    %8 = arith.subf %0, %7 : vector<16x32xf32>
    %9 = arith.mulf %8, %8 : vector<16x32xf32>
    %cst_6 = arith.constant dense<0.000000e+00> : vector<16xf32>
    %10 = vector.multi_reduction <add>, %9, %cst_6 [1] : vector<16x32xf32> to vector<16xf32>
    %11 = vector.shape_cast %10 : vector<16xf32> to vector<16x1xf32>
    %cst_7 = arith.constant 3.200000e+01 : f32
    %12 = vector.broadcast %cst_7 : f32 to vector<16x1xf32>
    %13 = arith.divf %11, %12 : vector<16x1xf32>
    %14 = vector.broadcast %6 : vector<16x1xf32> to vector<16x32xf32>
    %15 = arith.subf %0, %14 : vector<16x32xf32>
    %cst_8 = arith.constant 9.99999974E-6 : f32
    %16 = vector.broadcast %cst_8 : f32 to vector<16x1xf32>
    %17 = arith.addf %13, %16 : vector<16x1xf32>
    %18 = math.rsqrt %17 : vector<16x1xf32>
    %19 = vector.broadcast %18 : vector<16x1xf32> to vector<16x32xf32>
    %20 = arith.mulf %15, %19 : vector<16x32xf32>
    %21 = vector.broadcast %1 : vector<1x32xf32> to vector<16x32xf32>
    %22 = arith.mulf %20, %21 : vector<16x32xf32>
    %23 = vector.broadcast %2 : vector<1x32xf32> to vector<16x32xf32>
    %24 = arith.addf %22, %23 : vector<16x32xf32>
    %25 = arith.truncf %24 : vector<16x32xf32> to vector<16x32xbf16>
    %c0_9 = arith.constant 0 : index
    %c0_10 = arith.constant 0 : index
    %26 = vector.load %arg5[%c0_9, %c0_10] : memref<32x96xbf16, #tpu.memory_space<vmem>>, vector<32x96xbf16>
    %cst_11 = arith.constant dense<0.000000e+00> : vector<16x96xf32>
    %27 = tpu.matmul %25, %26, %cst_11 {dimension_numbers = #tpu.dot_dimension_numbers<[1], [0], [0], [1], [0, 0, 1, 1], [], []>} : vector<16x32xbf16>, vector<32x96xbf16>, vector<16x96xf32> -> vector<16x96xf32>
    %c0_12 = arith.constant 0 : index
    %c0_13 = arith.constant 0 : index
    %28 = vector.load %arg6[%c0_12, %c0_13] : memref<1x96xf32, #tpu.memory_space<vmem>>, vector<1x96xf32>
    %29 = vector.broadcast %28 : vector<1x96xf32> to vector<16x96xf32>
    %30 = arith.addf %27, %29 : vector<16x96xf32>
    %31 = vector.extract_strided_slice %30 {offsets = [0, 0], sizes = [16, 32], strides = [1, 1]} : vector<16x96xf32> to vector<16x32xf32>
    %32 = vector.extract_strided_slice %30 {offsets = [0, 32], sizes = [16, 32], strides = [1, 1]} : vector<16x96xf32> to vector<16x32xf32>
    %33 = vector.extract_strided_slice %30 {offsets = [0, 64], sizes = [16, 32], strides = [1, 1]} : vector<16x96xf32> to vector<16x32xf32>
    %34 = vector.shape_cast %31 : vector<16x32xf32> to vector<2x8x32xf32>
    %35 = arith.truncf %34 : vector<2x8x32xf32> to vector<2x8x32xbf16>
    %36 = vector.shape_cast %32 : vector<16x32xf32> to vector<2x8x32xf32>
    %37 = arith.truncf %36 : vector<2x8x32xf32> to vector<2x8x32xbf16>
    %38 = vector.shape_cast %33 : vector<16x32xf32> to vector<2x8x32xf32>
    %39 = arith.truncf %38 : vector<2x8x32xf32> to vector<2x8x32xbf16>
    %c0_14 = arith.constant 0 : index
    %c0_15 = arith.constant 0 : index
    %c0_16 = arith.constant 0 : index
    %40 = vector.load %arg1[%c0_14, %c0_15, %c0_16] : memref<2x8x8xf32, #tpu.memory_space<vmem>>, vector<2x8x8xf32>
    %c0_17 = arith.constant 0 : index
    %c0_18 = arith.constant 0 : index
    %c0_19 = arith.constant 0 : index
    %41 = vector.load %arg2[%c0_17, %c0_18, %c0_19] : memref<4x2x8xf32, #tpu.memory_space<vmem>>, vector<4x2x8xf32>
    %42 = vector.extract_strided_slice %35 {offsets = [0, 0, 0], sizes = [2, 8, 8], strides = [1, 1, 1]} : vector<2x8x32xbf16> to vector<2x8x8xbf16>
    %43 = vector.extract_strided_slice %37 {offsets = [0, 0, 0], sizes = [2, 8, 8], strides = [1, 1, 1]} : vector<2x8x32xbf16> to vector<2x8x8xbf16>
    "tpu.trace_start"() <{level = 10 : i32, message = "bqd,bkd->bqk"}> : () -> ()
    %cst_20 = arith.constant dense<0.000000e+00> : vector<2x8x8xf32>
    %44 = tpu.matmul %42, %43, %cst_20 {dimension_numbers = #tpu.dot_dimension_numbers<[2], [2], [1], [1], [0, 0, 0, 1, 1, 1], [0], [0]>} : vector<2x8x8xbf16>, vector<2x8x8xbf16>, vector<2x8x8xf32> -> vector<2x8x8xf32>
    "tpu.trace_stop"() : () -> ()
    %45 = vector.extract_strided_slice %41 {offsets = [0, 0, 0], sizes = [1, 2, 8], strides = [1, 1, 1]} : vector<4x2x8xf32> to vector<1x2x8xf32>
    %46 = vector.shape_cast %45 : vector<1x2x8xf32> to vector<2x8xf32>
    %47 = vector.shape_cast %46 : vector<2x8xf32> to vector<2x1x8xf32>
    %48 = vector.broadcast %47 : vector<2x1x8xf32> to vector<2x8x8xf32>
    %49 = arith.addf %44, %48 : vector<2x8x8xf32>
    %50 = arith.addf %49, %40 : vector<2x8x8xf32>
    %cst_21 = arith.constant dense<0xFF800000> : vector<2x8xf32>
    %51 = vector.multi_reduction <maximumf>, %50, %cst_21 [2] : vector<2x8x8xf32> to vector<2x8xf32>
    %52 = vector.shape_cast %51 : vector<2x8xf32> to vector<2x8x1xf32>
    %53 = vector.broadcast %52 : vector<2x8x1xf32> to vector<2x8x8xf32>
    %54 = arith.subf %50, %53 : vector<2x8x8xf32>
    %55 = math.exp %54 : vector<2x8x8xf32>
    %cst_22 = arith.constant dense<0.000000e+00> : vector<2x8xf32>
    %56 = vector.multi_reduction <add>, %55, %cst_22 [2] : vector<2x8x8xf32> to vector<2x8xf32>
    %57 = vector.shape_cast %56 : vector<2x8xf32> to vector<2x8x1xf32>
    %58 = tpu.reciprocal %57 {approx = true} : vector<2x8x1xf32> -> vector<2x8x1xf32>
    %59 = vector.broadcast %58 : vector<2x8x1xf32> to vector<2x8x8xf32>
    %60 = arith.mulf %55, %59 : vector<2x8x8xf32>
    %61 = arith.truncf %60 : vector<2x8x8xf32> to vector<2x8x8xbf16>
    %62 = vector.extract_strided_slice %39 {offsets = [0, 0, 0], sizes = [2, 8, 8], strides = [1, 1, 1]} : vector<2x8x32xbf16> to vector<2x8x8xbf16>
    "tpu.trace_start"() <{level = 10 : i32, message = "bqk,bkd->bqd"}> : () -> ()
    %cst_23 = arith.constant dense<0.000000e+00> : vector<2x8x8xf32>
    %63 = tpu.matmul %61, %62, %cst_23 {dimension_numbers = #tpu.dot_dimension_numbers<[2], [1], [1], [2], [0, 0, 0, 1, 1, 2], [0], [0]>} : vector<2x8x8xbf16>, vector<2x8x8xbf16>, vector<2x8x8xf32> -> vector<2x8x8xf32>
    "tpu.trace_stop"() : () -> ()
    %64 = vector.extract_strided_slice %35 {offsets = [0, 0, 8], sizes = [2, 8, 8], strides = [1, 1, 1]} : vector<2x8x32xbf16> to vector<2x8x8xbf16>
    %65 = vector.extract_strided_slice %37 {offsets = [0, 0, 8], sizes = [2, 8, 8], strides = [1, 1, 1]} : vector<2x8x32xbf16> to vector<2x8x8xbf16>
    "tpu.trace_start"() <{level = 10 : i32, message = "bqd,bkd->bqk"}> : () -> ()
    %cst_24 = arith.constant dense<0.000000e+00> : vector<2x8x8xf32>
    %66 = tpu.matmul %64, %65, %cst_24 {dimension_numbers = #tpu.dot_dimension_numbers<[2], [2], [1], [1], [0, 0, 0, 1, 1, 1], [0], [0]>} : vector<2x8x8xbf16>, vector<2x8x8xbf16>, vector<2x8x8xf32> -> vector<2x8x8xf32>
    "tpu.trace_stop"() : () -> ()
    %67 = vector.extract_strided_slice %41 {offsets = [1, 0, 0], sizes = [1, 2, 8], strides = [1, 1, 1]} : vector<4x2x8xf32> to vector<1x2x8xf32>
    %68 = vector.shape_cast %67 : vector<1x2x8xf32> to vector<2x8xf32>
    %69 = vector.shape_cast %68 : vector<2x8xf32> to vector<2x1x8xf32>
    %70 = vector.broadcast %69 : vector<2x1x8xf32> to vector<2x8x8xf32>
    %71 = arith.addf %66, %70 : vector<2x8x8xf32>
    %72 = arith.addf %71, %40 : vector<2x8x8xf32>
    %cst_25 = arith.constant dense<0xFF800000> : vector<2x8xf32>
    %73 = vector.multi_reduction <maximumf>, %72, %cst_25 [2] : vector<2x8x8xf32> to vector<2x8xf32>
    %74 = vector.shape_cast %73 : vector<2x8xf32> to vector<2x8x1xf32>
    %75 = vector.broadcast %74 : vector<2x8x1xf32> to vector<2x8x8xf32>
    %76 = arith.subf %72, %75 : vector<2x8x8xf32>
    %77 = math.exp %76 : vector<2x8x8xf32>
    %cst_26 = arith.constant dense<0.000000e+00> : vector<2x8xf32>
    %78 = vector.multi_reduction <add>, %77, %cst_26 [2] : vector<2x8x8xf32> to vector<2x8xf32>
    %79 = vector.shape_cast %78 : vector<2x8xf32> to vector<2x8x1xf32>
    %80 = tpu.reciprocal %79 {approx = true} : vector<2x8x1xf32> -> vector<2x8x1xf32>
    %81 = vector.broadcast %80 : vector<2x8x1xf32> to vector<2x8x8xf32>
    %82 = arith.mulf %77, %81 : vector<2x8x8xf32>
    %83 = arith.truncf %82 : vector<2x8x8xf32> to vector<2x8x8xbf16>
    %84 = vector.extract_strided_slice %39 {offsets = [0, 0, 8], sizes = [2, 8, 8], strides = [1, 1, 1]} : vector<2x8x32xbf16> to vector<2x8x8xbf16>
    "tpu.trace_start"() <{level = 10 : i32, message = "bqk,bkd->bqd"}> : () -> ()
    %cst_27 = arith.constant dense<0.000000e+00> : vector<2x8x8xf32>
    %85 = tpu.matmul %83, %84, %cst_27 {dimension_numbers = #tpu.dot_dimension_numbers<[2], [1], [1], [2], [0, 0, 0, 1, 1, 2], [0], [0]>} : vector<2x8x8xbf16>, vector<2x8x8xbf16>, vector<2x8x8xf32> -> vector<2x8x8xf32>
    "tpu.trace_stop"() : () -> ()
    %86 = vector.extract_strided_slice %35 {offsets = [0, 0, 16], sizes = [2, 8, 8], strides = [1, 1, 1]} : vector<2x8x32xbf16> to vector<2x8x8xbf16>
    %87 = vector.extract_strided_slice %37 {offsets = [0, 0, 16], sizes = [2, 8, 8], strides = [1, 1, 1]} : vector<2x8x32xbf16> to vector<2x8x8xbf16>
    "tpu.trace_start"() <{level = 10 : i32, message = "bqd,bkd->bqk"}> : () -> ()
    %cst_28 = arith.constant dense<0.000000e+00> : vector<2x8x8xf32>
    %88 = tpu.matmul %86, %87, %cst_28 {dimension_numbers = #tpu.dot_dimension_numbers<[2], [2], [1], [1], [0, 0, 0, 1, 1, 1], [0], [0]>} : vector<2x8x8xbf16>, vector<2x8x8xbf16>, vector<2x8x8xf32> -> vector<2x8x8xf32>
    "tpu.trace_stop"() : () -> ()
    %89 = vector.extract_strided_slice %41 {offsets = [2, 0, 0], sizes = [1, 2, 8], strides = [1, 1, 1]} : vector<4x2x8xf32> to vector<1x2x8xf32>
    %90 = vector.shape_cast %89 : vector<1x2x8xf32> to vector<2x8xf32>
    %91 = vector.shape_cast %90 : vector<2x8xf32> to vector<2x1x8xf32>
    %92 = vector.broadcast %91 : vector<2x1x8xf32> to vector<2x8x8xf32>
    %93 = arith.addf %88, %92 : vector<2x8x8xf32>
    %94 = arith.addf %93, %40 : vector<2x8x8xf32>
    %cst_29 = arith.constant dense<0xFF800000> : vector<2x8xf32>
    %95 = vector.multi_reduction <maximumf>, %94, %cst_29 [2] : vector<2x8x8xf32> to vector<2x8xf32>
    %96 = vector.shape_cast %95 : vector<2x8xf32> to vector<2x8x1xf32>
    %97 = vector.broadcast %96 : vector<2x8x1xf32> to vector<2x8x8xf32>
    %98 = arith.subf %94, %97 : vector<2x8x8xf32>
    %99 = math.exp %98 : vector<2x8x8xf32>
    %cst_30 = arith.constant dense<0.000000e+00> : vector<2x8xf32>
    %100 = vector.multi_reduction <add>, %99, %cst_30 [2] : vector<2x8x8xf32> to vector<2x8xf32>
    %101 = vector.shape_cast %100 : vector<2x8xf32> to vector<2x8x1xf32>
    %102 = tpu.reciprocal %101 {approx = true} : vector<2x8x1xf32> -> vector<2x8x1xf32>
    %103 = vector.broadcast %102 : vector<2x8x1xf32> to vector<2x8x8xf32>
    %104 = arith.mulf %99, %103 : vector<2x8x8xf32>
    %105 = arith.truncf %104 : vector<2x8x8xf32> to vector<2x8x8xbf16>
    %106 = vector.extract_strided_slice %39 {offsets = [0, 0, 16], sizes = [2, 8, 8], strides = [1, 1, 1]} : vector<2x8x32xbf16> to vector<2x8x8xbf16>
    "tpu.trace_start"() <{level = 10 : i32, message = "bqk,bkd->bqd"}> : () -> ()
    %cst_31 = arith.constant dense<0.000000e+00> : vector<2x8x8xf32>
    %107 = tpu.matmul %105, %106, %cst_31 {dimension_numbers = #tpu.dot_dimension_numbers<[2], [1], [1], [2], [0, 0, 0, 1, 1, 2], [0], [0]>} : vector<2x8x8xbf16>, vector<2x8x8xbf16>, vector<2x8x8xf32> -> vector<2x8x8xf32>
    "tpu.trace_stop"() : () -> ()
    %108 = vector.extract_strided_slice %35 {offsets = [0, 0, 24], sizes = [2, 8, 8], strides = [1, 1, 1]} : vector<2x8x32xbf16> to vector<2x8x8xbf16>
    %109 = vector.extract_strided_slice %37 {offsets = [0, 0, 24], sizes = [2, 8, 8], strides = [1, 1, 1]} : vector<2x8x32xbf16> to vector<2x8x8xbf16>
    "tpu.trace_start"() <{level = 10 : i32, message = "bqd,bkd->bqk"}> : () -> ()
    %cst_32 = arith.constant dense<0.000000e+00> : vector<2x8x8xf32>
    %110 = tpu.matmul %108, %109, %cst_32 {dimension_numbers = #tpu.dot_dimension_numbers<[2], [2], [1], [1], [0, 0, 0, 1, 1, 1], [0], [0]>} : vector<2x8x8xbf16>, vector<2x8x8xbf16>, vector<2x8x8xf32> -> vector<2x8x8xf32>
    "tpu.trace_stop"() : () -> ()
    %111 = vector.extract_strided_slice %41 {offsets = [3, 0, 0], sizes = [1, 2, 8], strides = [1, 1, 1]} : vector<4x2x8xf32> to vector<1x2x8xf32>
    %112 = vector.shape_cast %111 : vector<1x2x8xf32> to vector<2x8xf32>
    %113 = vector.shape_cast %112 : vector<2x8xf32> to vector<2x1x8xf32>
    %114 = vector.broadcast %113 : vector<2x1x8xf32> to vector<2x8x8xf32>
    %115 = arith.addf %110, %114 : vector<2x8x8xf32>
    %116 = arith.addf %115, %40 : vector<2x8x8xf32>
    %cst_33 = arith.constant dense<0xFF800000> : vector<2x8xf32>
    %117 = vector.multi_reduction <maximumf>, %116, %cst_33 [2] : vector<2x8x8xf32> to vector<2x8xf32>
    %118 = vector.shape_cast %117 : vector<2x8xf32> to vector<2x8x1xf32>
    %119 = vector.broadcast %118 : vector<2x8x1xf32> to vector<2x8x8xf32>
    %120 = arith.subf %116, %119 : vector<2x8x8xf32>
    %121 = math.exp %120 : vector<2x8x8xf32>
    %cst_34 = arith.constant dense<0.000000e+00> : vector<2x8xf32>
    %122 = vector.multi_reduction <add>, %121, %cst_34 [2] : vector<2x8x8xf32> to vector<2x8xf32>
    %123 = vector.shape_cast %122 : vector<2x8xf32> to vector<2x8x1xf32>
    %124 = tpu.reciprocal %123 {approx = true} : vector<2x8x1xf32> -> vector<2x8x1xf32>
    %125 = vector.broadcast %124 : vector<2x8x1xf32> to vector<2x8x8xf32>
    %126 = arith.mulf %121, %125 : vector<2x8x8xf32>
    %127 = arith.truncf %126 : vector<2x8x8xf32> to vector<2x8x8xbf16>
    %128 = vector.extract_strided_slice %39 {offsets = [0, 0, 24], sizes = [2, 8, 8], strides = [1, 1, 1]} : vector<2x8x32xbf16> to vector<2x8x8xbf16>
    "tpu.trace_start"() <{level = 10 : i32, message = "bqk,bkd->bqd"}> : () -> ()
    %cst_35 = arith.constant dense<0.000000e+00> : vector<2x8x8xf32>
    %129 = tpu.matmul %127, %128, %cst_35 {dimension_numbers = #tpu.dot_dimension_numbers<[2], [1], [1], [2], [0, 0, 0, 1, 1, 2], [0], [0]>} : vector<2x8x8xbf16>, vector<2x8x8xbf16>, vector<2x8x8xf32> -> vector<2x8x8xf32>
    "tpu.trace_stop"() : () -> ()
    %130 = tpu.concatenate %63, %85, %107, %129 in 2 : vector<2x8x8xf32>, vector<2x8x8xf32>, vector<2x8x8xf32>, vector<2x8x8xf32> -> vector<2x8x32xf32>
    %131 = vector.shape_cast %130 : vector<2x8x32xf32> to vector<16x32xf32>
    %132 = arith.truncf %131 : vector<16x32xf32> to vector<16x32xbf16>
    %c0_36 = arith.constant 0 : index
    %c0_37 = arith.constant 0 : index
    %133 = vector.load %arg7[%c0_36, %c0_37] : memref<32x32xbf16, #tpu.memory_space<vmem>>, vector<32x32xbf16>
    %cst_38 = arith.constant dense<0.000000e+00> : vector<16x32xf32>
    %134 = tpu.matmul %132, %133, %cst_38 {dimension_numbers = #tpu.dot_dimension_numbers<[1], [0], [0], [1], [0, 0, 1, 1], [], []>} : vector<16x32xbf16>, vector<32x32xbf16>, vector<16x32xf32> -> vector<16x32xf32>
    %c0_39 = arith.constant 0 : index
    %c0_40 = arith.constant 0 : index
    %135 = vector.load %arg8[%c0_39, %c0_40] : memref<1x32xf32, #tpu.memory_space<vmem>>, vector<1x32xf32>
    %136 = vector.broadcast %135 : vector<1x32xf32> to vector<16x32xf32>
    %137 = arith.addf %134, %136 : vector<16x32xf32>
    %138 = arith.addf %137, %0 : vector<16x32xf32>
    %c0_41 = arith.constant 0 : index
    %c0_42 = arith.constant 0 : index
    %139 = vector.load %arg9[%c0_41, %c0_42] : memref<1x32xf32, #tpu.memory_space<vmem>>, vector<1x32xf32>
    %c0_43 = arith.constant 0 : index
    %c0_44 = arith.constant 0 : index
    %140 = vector.load %arg10[%c0_43, %c0_44] : memref<1x32xf32, #tpu.memory_space<vmem>>, vector<1x32xf32>
    %cst_45 = arith.constant dense<0.000000e+00> : vector<16xf32>
    %141 = vector.multi_reduction <add>, %138, %cst_45 [1] : vector<16x32xf32> to vector<16xf32>
    %142 = vector.shape_cast %141 : vector<16xf32> to vector<16x1xf32>
    %cst_46 = arith.constant 3.200000e+01 : f32
    %143 = vector.broadcast %cst_46 : f32 to vector<16x1xf32>
    %144 = arith.divf %142, %143 : vector<16x1xf32>
    %145 = vector.broadcast %144 : vector<16x1xf32> to vector<16x32xf32>
    %146 = arith.subf %138, %145 : vector<16x32xf32>
    %147 = arith.mulf %146, %146 : vector<16x32xf32>
    %cst_47 = arith.constant dense<0.000000e+00> : vector<16xf32>
    %148 = vector.multi_reduction <add>, %147, %cst_47 [1] : vector<16x32xf32> to vector<16xf32>
    %149 = vector.shape_cast %148 : vector<16xf32> to vector<16x1xf32>
    %cst_48 = arith.constant 3.200000e+01 : f32
    %150 = vector.broadcast %cst_48 : f32 to vector<16x1xf32>
    %151 = arith.divf %149, %150 : vector<16x1xf32>
    %152 = vector.broadcast %144 : vector<16x1xf32> to vector<16x32xf32>
    %153 = arith.subf %138, %152 : vector<16x32xf32>
    %cst_49 = arith.constant 9.99999974E-6 : f32
    %154 = vector.broadcast %cst_49 : f32 to vector<16x1xf32>
    %155 = arith.addf %151, %154 : vector<16x1xf32>
    %156 = math.rsqrt %155 : vector<16x1xf32>
    %157 = vector.broadcast %156 : vector<16x1xf32> to vector<16x32xf32>
    %158 = arith.mulf %153, %157 : vector<16x32xf32>
    %159 = vector.broadcast %139 : vector<1x32xf32> to vector<16x32xf32>
    %160 = arith.mulf %158, %159 : vector<16x32xf32>
    %161 = vector.broadcast %140 : vector<1x32xf32> to vector<16x32xf32>
    %162 = arith.addf %160, %161 : vector<16x32xf32>
    %163 = arith.truncf %162 : vector<16x32xf32> to vector<16x32xbf16>
    %c0_50 = arith.constant 0 : index
    %c0_51 = arith.constant 0 : index
    %164 = vector.load %arg11[%c0_50, %c0_51] : memref<32x128xbf16, #tpu.memory_space<vmem>>, vector<32x128xbf16>
    %cst_52 = arith.constant dense<0.000000e+00> : vector<16x128xf32>
    %165 = tpu.matmul %163, %164, %cst_52 {dimension_numbers = #tpu.dot_dimension_numbers<[1], [0], [0], [1], [0, 0, 1, 1], [], []>} : vector<16x32xbf16>, vector<32x128xbf16>, vector<16x128xf32> -> vector<16x128xf32>
    %c0_53 = arith.constant 0 : index
    %c0_54 = arith.constant 0 : index
    %166 = vector.load %arg12[%c0_53, %c0_54] : memref<1x128xf32, #tpu.memory_space<vmem>>, vector<1x128xf32>
    %167 = vector.broadcast %166 : vector<1x128xf32> to vector<16x128xf32>
    %168 = arith.addf %165, %167 : vector<16x128xf32>
    %cst_55 = arith.constant 5.000000e-01 : f32
    %169 = vector.broadcast %cst_55 : f32 to vector<16x128xf32>
    %170 = arith.mulf %168, %169 : vector<16x128xf32>
    %cst_56 = arith.constant 0.797884583 : f32
    %171 = vector.broadcast %cst_56 : f32 to vector<16x128xf32>
    %172 = arith.mulf %171, %168 : vector<16x128xf32>
    %cst_57 = arith.constant 4.471500e-02 : f32
    %173 = vector.broadcast %cst_57 : f32 to vector<16x128xf32>
    %174 = arith.mulf %173, %168 : vector<16x128xf32>
    %175 = arith.mulf %174, %168 : vector<16x128xf32>
    %cst_58 = arith.constant 1.000000e+00 : f32
    %176 = vector.broadcast %cst_58 : f32 to vector<16x128xf32>
    %177 = arith.addf %176, %175 : vector<16x128xf32>
    %178 = arith.mulf %172, %177 : vector<16x128xf32>
    %179 = math.tanh %178 : vector<16x128xf32>
    %cst_59 = arith.constant 1.000000e+00 : f32
    %180 = vector.broadcast %cst_59 : f32 to vector<16x128xf32>
    %181 = arith.addf %180, %179 : vector<16x128xf32>
    %182 = arith.mulf %170, %181 : vector<16x128xf32>
    %183 = arith.truncf %182 : vector<16x128xf32> to vector<16x128xbf16>
    %c0_60 = arith.constant 0 : index
    %c0_61 = arith.constant 0 : index
    %184 = vector.load %arg13[%c0_60, %c0_61] : memref<128x32xbf16, #tpu.memory_space<vmem>>, vector<128x32xbf16>
    %cst_62 = arith.constant dense<0.000000e+00> : vector<16x32xf32>
    %185 = tpu.matmul %183, %184, %cst_62 {dimension_numbers = #tpu.dot_dimension_numbers<[1], [0], [0], [1], [0, 0, 1, 1], [], []>} : vector<16x128xbf16>, vector<128x32xbf16>, vector<16x32xf32> -> vector<16x32xf32>
    %c0_63 = arith.constant 0 : index
    %c0_64 = arith.constant 0 : index
    %186 = vector.load %arg14[%c0_63, %c0_64] : memref<1x32xf32, #tpu.memory_space<vmem>>, vector<1x32xf32>
    %187 = vector.broadcast %186 : vector<1x32xf32> to vector<16x32xf32>
    %188 = arith.addf %185, %187 : vector<16x32xf32>
    %189 = arith.addf %188, %138 : vector<16x32xf32>
    %cst_65 = arith.constant 0.000000e+00 : f32
    %190 = vector.broadcast %cst_65 : f32 to vector<16x32xf32>
    %191 = tpu.concatenate %189, %32, %33, %190 in 1 : vector<16x32xf32>, vector<16x32xf32>, vector<16x32xf32>, vector<16x32xf32> -> vector<16x128xf32>
    %c0_66 = arith.constant 0 : index
    %c0_67 = arith.constant 0 : index
    %192 = vector.load %arg15[%c0_66, %c0_67] : memref<16x128xf32, #tpu.memory_space<vmem>>, vector<16x128xf32>
    tpu.vector_store %arg15[%c0_66, %c0_67], %191 {strides = array<i32>} : memref<16x128xf32, #tpu.memory_space<vmem>>, vector<16x128xf32>,
    return
  }
}

</mosaic_0001>

<llo_original>
// kernel: tpu_custom_call.1
$region0: #{tpu_custom_call.1}
  #allocation0 [shape = 'u32[]', space=smem, size = 0x4, offset = 0x4, fixed_abs, tag = 'smem constant byte address 0x4 - core index']
  #allocation1 [shape = 'u32[144,128]{1,0:T(1,128)}', space=vmem, size = 0x12000, scoped, tag = 'internal scratch']
  %s0 = inlined_call_operand.vmem [shape: f32[16,32], index: 0, kind: input, shape index: {}]
  %s1 = inlined_call_operand.vmem [shape: f32[2,8,8], index: 1, kind: input, shape index: {}]
  %s2 = inlined_call_operand.hbm [shape: f32[4,2,8], index: 2, kind: input, shape index: {}]
  %s3 = inlined_call_operand.vmem [shape: f32[1,32], index: 3, kind: input, shape index: {}]
  %s4 = inlined_call_operand.vmem [shape: f32[1,32], index: 4, kind: input, shape index: {}]
  %s5 = inlined_call_operand.vmem [shape: bf16[32,96], index: 5, kind: input, shape index: {}]
  %s6 = inlined_call_operand.vmem [shape: f32[1,96], index: 6, kind: input, shape index: {}]
  %s7 = inlined_call_operand.vmem [shape: bf16[32,32], index: 7, kind: input, shape index: {}]
  %s8 = inlined_call_operand.vmem [shape: f32[1,32], index: 8, kind: input, shape index: {}]
  %s9 = inlined_call_operand.vmem [shape: f32[1,32], index: 9, kind: input, shape index: {}]
  %s10 = inlined_call_operand.vmem [shape: f32[1,32], index: 10, kind: input, shape index: {}]
  %s11 = inlined_call_operand.vmem [shape: bf16[32,128], index: 11, kind: input, shape index: {}]
  %s12 = inlined_call_operand.vmem [shape: f32[1,128], index: 12, kind: input, shape index: {}]
  %s13 = inlined_call_operand.vmem [shape: bf16[128,32], index: 13, kind: input, shape index: {}]
  %s14 = inlined_call_operand.vmem [shape: f32[1,32], index: 14, kind: input, shape index: {}]
  %s15 = inlined_call_operand.hbm [shape: f32[16,128], index: 15, kind: output, shape index: {}]
  %s16 = sld [smem:[#allocation0]]
  $region74: #{tpu_custom_call.1} parent=0
    _
  %s18 = ssub.s32 1, %s16
  %s19 = scalar_select 0, %s18, %s16
  $region1: #{tpu_custom_call.1} parent=0
    #allocation2 [shape = 'u8[4096]{0}', space=vmem, size = 0x1000, scoped, tag = 'input window, operand 2, single buffered']
    #allocation3 [shape = 's32[1]{0}', space=sflag, size = 0x4, scoped, tag = 'scoped memory for tpu_custom_call.1']
    #allocation4 [shape = 's32[1]{0}', space=sflag, size = 0x4, scoped, tag = 'scoped memory for tpu_custom_call.1']
    #allocation5 [shape = 'u8[8192]{0}', space=vmem, size = 0x2000, scoped, tag = 'output window, operand 0, single buffered']
    %20 = vsyncpa [#allocation3], 0
    %21 = vsyncpa [#allocation4], 0
    // Predicated region
    $region2: #{tpu_custom_call.1} parent=1 // pred_check
      _
    $region3: #{tpu_custom_call.1} parent=1 // pred_check_branch
      %23 = sbr.rel (0) target = $region5
    $region4: #{tpu_custom_call.1} parent=1 // pred_region
      _
    $region5: #{tpu_custom_call.1} parent=1 // pred_fallthru
      _
    // Predicated region
    $region6: #{tpu_custom_call.1} parent=1 // pred_check
      _
    $region7: #{tpu_custom_call.1} parent=1 // pred_check_branch
      %25 = sbr.rel (0) target = $region9
    $region8: #{tpu_custom_call.1} parent=1 // pred_region
      _
    $region9: #{tpu_custom_call.1} parent=1 // pred_fallthru
      _
    // Predicated region
    $region10: #{tpu_custom_call.1} parent=1 // pred_check
      _
    $region11: #{tpu_custom_call.1} parent=1 // pred_check_branch
      %27 = sbr.rel (0) target = $region13
    $region12: #{tpu_custom_call.1} parent=1 // pred_region
      %s29 = ssub.s32 128, 128
      %30 = vsyncadd [#allocation3], %s29
      %s31 = sshll.u32 [#allocation2], 4
      %s32 = int_to_ptr.vmem [resolvable:$true] %s31
      %37 = dma.hbm_to_vmem [thread:$0]  %s2, 128, %s32, [#allocation3], 32, 32, 2
    $region13: #{tpu_custom_call.1} parent=1 // pred_fallthru
      _
    // Predicated region
    $region14: #{tpu_custom_call.1} parent=1 // pred_check
      _
    $region15: #{tpu_custom_call.1} parent=1 // pred_check_branch
      %39 = sbr.rel (0) target = $region17
    $region16: #{tpu_custom_call.1} parent=1 // pred_region
      _
    $region17: #{tpu_custom_call.1} parent=1 // pred_fallthru
      _
    // Predicated region
    $region18: #{tpu_custom_call.1} parent=1 // pred_check
      _
    $region19: #{tpu_custom_call.1} parent=1 // pred_check_branch
      %41 = sbr.rel (0) target = $region21
    $region20: #{tpu_custom_call.1} parent=1 // pred_region
      _
    $region21: #{tpu_custom_call.1} parent=1 // pred_fallthru
      _
    // Predicated region
    $region22: #{tpu_custom_call.1} parent=1 // pred_check
      _
    $region23: #{tpu_custom_call.1} parent=1 // pred_check_branch
      %43 = sbr.rel (0) target = $region25
    $region24: #{tpu_custom_call.1} parent=1 // pred_region
      _
    $region25: #{tpu_custom_call.1} parent=1 // pred_fallthru
      _
    // Predicated region
    $region26: #{tpu_custom_call.1} parent=1 // pred_check
      _
    $region27: #{tpu_custom_call.1} parent=1 // pred_check_branch
      %45 = sbr.rel (0) target = $region29
    $region28: #{tpu_custom_call.1} parent=1 // pred_region
      _
    $region29: #{tpu_custom_call.1} parent=1 // pred_fallthru
      _
    // Predicated region
    $region30: #{tpu_custom_call.1} parent=1 // pred_check
      _
    $region31: #{tpu_custom_call.1} parent=1 // pred_check_branch
      %47 = sbr.rel (0) target = $region33
    $region32: #{tpu_custom_call.1} parent=1 // pred_region
      _
    $region33: #{tpu_custom_call.1} parent=1 // pred_fallthru
      _
    // Predicated region
    $region34: #{tpu_custom_call.1} parent=1 // pred_check
      _
    $region35: #{tpu_custom_call.1} parent=1 // pred_check_branch
      %49 = sbr.rel (0) target = $region37
    $region36: #{tpu_custom_call.1} parent=1 // pred_region
      _
    $region37: #{tpu_custom_call.1} parent=1 // pred_fallthru
      _
    // Predicated region
    $region38: #{tpu_custom_call.1} parent=1 // pred_check
      _
    $region39: #{tpu_custom_call.1} parent=1 // pred_check_branch
      %51 = sbr.rel (0) target = $region41
    $region40: #{tpu_custom_call.1} parent=1 // pred_region
      _
    $region41: #{tpu_custom_call.1} parent=1 // pred_fallthru
      _
    // Predicated region
    $region42: #{tpu_custom_call.1} parent=1 // pred_check
      _
    $region43: #{tpu_custom_call.1} parent=1 // pred_check_branch
      %53 = sbr.rel (0) target = $region45
    $region44: #{tpu_custom_call.1} parent=1 // pred_region
      _
    $region45: #{tpu_custom_call.1} parent=1 // pred_fallthru
      _
    // Predicated region
    $region46: #{tpu_custom_call.1} parent=1 // pred_check
      _
    $region47: #{tpu_custom_call.1} parent=1 // pred_check_branch
      %55 = sbr.rel (0) target = $region49
    $region48: #{tpu_custom_call.1} parent=1 // pred_region
      _
    $region49: #{tpu_custom_call.1} parent=1 // pred_fallthru
      _
    // Predicated region
    $region50: #{tpu_custom_call.1} parent=1 // pred_check
      _
    $region51: #{tpu_custom_call.1} parent=1 // pred_check_branch
      %57 = sbr.rel (0) target = $region53
    $region52: #{tpu_custom_call.1} parent=1 // pred_region
      _
    $region53: #{tpu_custom_call.1} parent=1 // pred_fallthru
      _
    // Predicated region
    $region54: #{tpu_custom_call.1} parent=1 // pred_check
      _
    $region55: #{tpu_custom_call.1} parent=1 // pred_check_branch
      %59 = sbr.rel (0) target = $region57
    $region56: #{tpu_custom_call.1} parent=1 // pred_region
      _
    $region57: #{tpu_custom_call.1} parent=1 // pred_fallthru
      _
    // Predicated region
    $region58: #{tpu_custom_call.1} parent=1 // pred_check
      _
    $region59: #{tpu_custom_call.1} parent=1 // pred_check_branch
      %61 = sbr.rel (0) target = $region61
    $region60: #{tpu_custom_call.1} parent=1 // pred_region
      _
    $region61: #{tpu_custom_call.1} parent=1 // pred_fallthru
      _
    // Predicated region
    $region62: #{tpu_custom_call.1} parent=1 // pred_check
      _
    $region63: #{tpu_custom_call.1} parent=1 // pred_check_branch
      %63 = sbr.rel (0) target = $region65
    $region64: #{tpu_custom_call.1} parent=1 // pred_region
      %64 = dma.done [#allocation3], 128
    $region65: #{tpu_custom_call.1} parent=1 // pred_fallthru
      _
    %v66 = vld [vmem:[%s0] sm:$0xff]
    %v67 = vld [vmem:[%s0 + $0x8] sm:$0xff]
    %v68 = vld [vmem:[%s3] sm:$0x1]
    %v69 = vld [vmem:[%s4] sm:$0x1]
    %vm70 = vcmask 261120
    %v71 = vsel %vm70, %v66, 0.0
    %72 = vadd.xlane.f32.xlu0 %v71
    %v73 = vpop.xlane.xlu0 %72
    %v74 = vsel %vm70, %v67, 0.0
    %75 = vadd.xlane.f32.xlu0 %v74
    %v76 = vpop.xlane.xlu0 %75
    %v77 = vrcp.pop 32.0
    %v78 = vmul.f32 %v73, %v77
    %v79 = vmul.f32 %v76, %v77
    %v80 = vsub.f32 %v66, %v78
    %v81 = vsub.f32 %v67, %v79
    %v82 = vmul.f32 %v80, %v80
    %v83 = vmul.f32 %v81, %v81
    %v84 = vsel %vm70, %v82, 0.0
    %85 = vadd.xlane.f32.xlu0 %v84
    %v86 = vpop.xlane.xlu0 %85
    %v87 = vsel %vm70, %v83, 0.0
    %88 = vadd.xlane.f32.xlu0 %v87
    %v89 = vpop.xlane.xlu0 %88
    %v90 = vmul.f32 %v86, %v77
    %v91 = vmul.f32 %v89, %v77
    %v92 = vadd.f32 %v90, 1e-05
    %v93 = vadd.f32 %v91, 1e-05
    %v94 = vrsqrt.pop %v92
    %v95 = vrsqrt.pop %v93
    %v96 = vmul.f32 %v80, %v94
    %v97 = vmul.f32 %v81, %v95
    %v99 = vlaneseq
    %v100 = vshrl.u32 %v99, 7
    %v101 = vsub.s32 0, %v100
    %v102 = vrot.slane %v68, %v101
    %v104 = vmul.f32 %v96, %v102
    %v105 = vmul.f32 %v97, %v102
    %v107 = vlaneseq
    %v108 = vshrl.u32 %v107, 7
    %v109 = vsub.s32 0, %v108
    %v110 = vrot.slane %v69, %v109
    %v112 = vadd.f32 %v104, %v110
    %v113 = vadd.f32 %v105, %v110
    %v114 = vpack.c.bf16 %v113, %v112
    %v115 = vld [vmem:[%s5] sm:$0xf]
    %v116 = vld [vmem:[%s5 + $0x4] sm:$0xf]
    %v117 = vld [vmem:[%s5 + $0x8] sm:$0xf]
    %v118 = vld [vmem:[%s5 + $0xc] sm:$0xf]
    %v119 = vld [vmem:[%s6] sm:$0x1]
    %v121 = vlaneseq
    %v122 = vshrl.u32 %v121, 7
    %v123 = vsub.s32 0, %v122
    %v124 = vrot.slane %v119, %v123
    %v130 = vunpack.c.l.b16 %v115
    %v131 = vunpack.c.l.b16 %v116
    %v132 = vunpack.c.l.b16 %v117
    %v133 = vunpack.c.l.b16 %v118
    %v134 = vpack.c.b16 %v131, %v130
    %v135 = vpack.c.b16 %v133, %v132
    %v139 = vsel %vm70, %v114, 0
    %141 = vmatprep.subr.bf16.mxu0 0
    %142 = vmatpush1.bf16.msra.mxu0 0
    %143 = vmatprep.subr.bf16.mxu0 0
    %144 = vmatpush1.bf16.msra.mxu0 0
    %145 = vmatprep.subr.bf16.mxu0 0
    %146 = vmatpush1.bf16.msra.mxu0 0
    %147 = vmatprep.subr.bf16.mxu0 0
    %148 = vmatpush1.bf16.msra.mxu0 0
    %149 = vmatprep.subr.bf16.mxu0 0
    %150 = vmatpush1.bf16.msra.mxu0 0
    %151 = vmatprep.subr.bf16.mxu0 0
    %152 = vmatpush1.bf16.msra.mxu0 0
    %153 = vmatprep.subr.bf16.mxu0 0
    %154 = vmatpush1.bf16.msra.mxu0 %v135
    %155 = vmatprep.subr.bf16.mxu0 0
    %156 = vmatpush1.bf16.msra.mxu0 %v134
    %157 = vmatprep.subr.bf16.mxu0 0
    %158 = vmatpush2.bf16.msra.mxu0 0
    %159 = vmatprep.subr.bf16.mxu0 0
    %160 = vmatpush2.bf16.msra.mxu0 0
    %161 = vmatprep.subr.bf16.mxu0 0
    %162 = vmatpush2.bf16.msra.mxu0 0
    %163 = vmatprep.subr.bf16.mxu0 0
    %164 = vmatpush2.bf16.msra.mxu0 0
    %165 = vmatprep.subr.bf16.mxu0 0
    %166 = vmatpush2.bf16.msra.mxu0 0
    %167 = vmatprep.subr.bf16.mxu0 0
    %168 = vmatpush2.bf16.msra.mxu0 0
    %169 = vmatprep.subr.bf16.mxu0 0
    %170 = vmatpush2.bf16.msra.mxu0 0
    %171 = vmatprep.subr.bf16.mxu0 0
    %172 = vmatpush2.bf16.msra.mxu0 0
    %173 = vmatprep.mubr.bf16.mxu0 0
    %174 = vmatmul.mubr.bf16.gmra.mxu0 %v139
    %v175 = vpop.f32.mrf.mxu0
    %v176 = vadd.f32 %v124, %v175
    %v177 = vpop.f32.mrf.mxu0
    %v178 = vpop.f32.mrf.mxu0
    %v179 = vadd.f32 %v124, %v178
    %v180 = vpop.f32.mrf.mxu0
    %181 = vdwg.mxu0
    %v182 = vpack.c.bf16 %v176, %v176
    %v183 = vpack.c.bf16 %v179, %v179
    %v184 = vld [vmem:[%s1] sm:$0xff]
    %v185 = vld [vmem:[%s1 + $0x8] sm:$0xff]
    %v186 = vld [vmem:[#allocation2] sm:$0x3]
    %v187 = vld [vmem:[#allocation2 + $0x2] sm:$0x3]
    %v188 = vld [vmem:[#allocation2 + $0x4] sm:$0x3]
    %v189 = vld [vmem:[#allocation2 + $0x6] sm:$0x3]
    %v192 = vunpack.c.l.s4 1966171168
    %v193 = vunpack.c.0.s8 %v192
    %v194 = vlaneseq
    %v195 = vshrl.u32 %v194, 7
    %v196 = vsub.s32 %v193, %v195
    %v197 = vrot.slane %v186, %v196
    %v198 = vcombine.high %v197, %v197
    %v200 = vunpack.c.l.s4 1966171168
    %v201 = vunpack.c.0.s8 %v200
    %v202 = vlaneseq
    %v203 = vshrl.u32 %v202, 7
    %v204 = vsub.s32 %v201, %v203
    %v205 = vrot.slane %v197, %v204
    %v207 = vunpack.c.l.s4 1966171168
    %v208 = vunpack.c.0.s8 %v207
    %v209 = vlaneseq
    %v210 = vshrl.u32 %v209, 7
    %v211 = vsub.s32 %v208, %v210
    %v212 = vrot.slane %v198, %v211
    %v213 = vlaneseq
    %v214 = vshrl.u32 %v213, 7
    %v215 = vsub.s32 0, %v214
    %v216 = vrot.slane %v205, %v215
    %v217 = vlaneseq
    %v218 = vshrl.u32 %v217, 7
    %v219 = vsub.s32 0, %v218
    %v220 = vrot.slane %v212, %v219
    %224 = vrot.lane.b32.xlu0 %v182, 96
    %v225 = vpop.permute.xlu0 %224
    %vm226 = vcmask 64512
    %v228 = vsel %vm226, %v182, 0
    %v231 = vsel %vm226, %v225, 0
    %233 = vmatprep.subr.bf16.mxu0 0
    %234 = vmatpush1.bf16.xpose.msra.mxu0 0
    %235 = vmatprep.subr.bf16.mxu0 0
    %236 = vmatpush1.bf16.xpose.msra.mxu0 0
    %237 = vmatprep.subr.bf16.mxu0 0
    %238 = vmatpush1.bf16.xpose.msra.mxu0 0
    %239 = vmatprep.subr.bf16.mxu0 0
    %240 = vmatpush1.bf16.xpose.msra.mxu0 0
    %241 = vmatprep.subr.bf16.mxu0 0
    %242 = vmatpush1.bf16.xpose.msra.mxu0 0
    %243 = vmatprep.subr.bf16.mxu0 0
    %244 = vmatpush1.bf16.xpose.msra.mxu0 0
    %245 = vmatprep.subr.bf16.mxu0 0
    %246 = vmatpush1.bf16.xpose.msra.mxu0 0
    %247 = vmatprep.subr.bf16.mxu0 0
    %248 = vmatpush1.bf16.xpose.msra.mxu0 %v231
    %249 = vmatprep.subr.bf16.mxu0 0
    %250 = vmatpush2.bf16.xpose.msra.mxu0 0
    %251 = vmatprep.subr.bf16.mxu0 0
    %252 = vmatpush2.bf16.xpose.msra.mxu0 0
    %253 = vmatprep.subr.bf16.mxu0 0
    %254 = vmatpush2.bf16.xpose.msra.mxu0 0
    %255 = vmatprep.subr.bf16.mxu0 0
    %256 = vmatpush2.bf16.xpose.msra.mxu0 0
    %257 = vmatprep.subr.bf16.mxu0 0
    %258 = vmatpush2.bf16.xpose.msra.mxu0 0
    %259 = vmatprep.subr.bf16.mxu0 0
    %260 = vmatpush2.bf16.xpose.msra.mxu0 0
    %261 = vmatprep.subr.bf16.mxu0 0
    %262 = vmatpush2.bf16.xpose.msra.mxu0 0
    %263 = vmatprep.subr.bf16.mxu0 0
    %264 = vmatpush2.bf16.xpose.msra.mxu0 0
    %265 = vmatprep.mubr.bf16.mxu0 0
    %266 = vmatmul.mubr.bf16.gmra.mxu0 %v228
    %v267 = vpop.f32.mrf.mxu0
    %v268 = vadd.f32 %v216, %v267
    %v269 = vpop.f32.mrf.mxu0
    %v270 = vpop.f32.mrf.mxu0
    %v271 = vpop.f32.mrf.mxu0
    %272 = vdwg.mxu0
    %274 = vrot.lane.b32.xlu0 %v183, 96
    %v275 = vpop.permute.xlu0 %274
    %v277 = vsel %vm226, %v183, 0
    %v280 = vsel %vm226, %v275, 0
    %282 = vmatprep.subr.bf16.mxu0 0
    %283 = vmatpush1.bf16.xpose.msra.mxu0 0
    %284 = vmatprep.subr.bf16.mxu0 0
    %285 = vmatpush1.bf16.xpose.msra.mxu0 0
    %286 = vmatprep.subr.bf16.mxu0 0
    %287 = vmatpush1.bf16.xpose.msra.mxu0 0
    %288 = vmatprep.subr.bf16.mxu0 0
    %289 = vmatpush1.bf16.xpose.msra.mxu0 0
    %290 = vmatprep.subr.bf16.mxu0 0
    %291 = vmatpush1.bf16.xpose.msra.mxu0 0
    %292 = vmatprep.subr.bf16.mxu0 0
    %293 = vmatpush1.bf16.xpose.msra.mxu0 0
    %294 = vmatprep.subr.bf16.mxu0 0
    %295 = vmatpush1.bf16.xpose.msra.mxu0 0
    %296 = vmatprep.subr.bf16.mxu0 0
    %297 = vmatpush1.bf16.xpose.msra.mxu0 %v280
    %298 = vmatprep.subr.bf16.mxu0 0
    %299 = vmatpush2.bf16.xpose.msra.mxu0 0
    %300 = vmatprep.subr.bf16.mxu0 0
    %301 = vmatpush2.bf16.xpose.msra.mxu0 0
    %302 = vmatprep.subr.bf16.mxu0 0
    %303 = vmatpush2.bf16.xpose.msra.mxu0 0
    %304 = vmatprep.subr.bf16.mxu0 0
    %305 = vmatpush2.bf16.xpose.msra.mxu0 0
    %306 = vmatprep.subr.bf16.mxu0 0
    %307 = vmatpush2.bf16.xpose.msra.mxu0 0
    %308 = vmatprep.subr.bf16.mxu0 0
    %309 = vmatpush2.bf16.xpose.msra.mxu0 0
    %310 = vmatprep.subr.bf16.mxu0 0
    %311 = vmatpush2.bf16.xpose.msra.mxu0 0
    %312 = vmatprep.subr.bf16.mxu0 0
    %313 = vmatpush2.bf16.xpose.msra.mxu0 0
    %314 = vmatprep.mubr.bf16.mxu0 0
    %315 = vmatmul.mubr.bf16.gmra.mxu0 %v277
    %v316 = vpop.f32.mrf.mxu0
    %v317 = vadd.f32 %v220, %v316
    %v318 = vpop.f32.mrf.mxu0
    %v319 = vpop.f32.mrf.mxu0
    %v320 = vpop.f32.mrf.mxu0
    %321 = vdwg.mxu0
    %v322 = vadd.f32 %v268, %v184
    %v323 = vadd.f32 %v317, %v185
    %v324 = vsel %vm226, %v322, -inf
    %325 = vmax.xlane.f32.xlu0 %v324
    %v326 = vpop.xlane.xlu0 %325
    %v327 = vsel %vm226, %v323, -inf
    %328 = vmax.xlane.f32.xlu0 %v327
    %v329 = vpop.xlane.xlu0 %328
    %v330 = vsub.f32 %v322, %v326
    %v331 = vsub.f32 %v323, %v329
    %v332 = vmul.f32 %v330, 1.442695
    %v333 = vpow.pop %v332
    %v334 = vmul.f32 %v331, 1.442695
    %v335 = vpow.pop %v334
    %v336 = vsel %vm226, %v333, 0.0
    %337 = vadd.xlane.f32.xlu0 %v336
    %v338 = vpop.xlane.xlu0 %337
    %v339 = vsel %vm226, %v335, 0.0
    %340 = vadd.xlane.f32.xlu0 %v339
    %v341 = vpop.xlane.xlu0 %340
    %v342 = vrcp.pop %v338
    %v343 = vrcp.pop %v341
    %v344 = vmul.f32 %v333, %v342
    %v345 = vmul.f32 %v335, %v343
    %v346 = vpack.c.bf16 %v344, %v344
    %v347 = vpack.c.bf16 %v345, %v345
    %348 = vrot.lane.b32.xlu0 %v182, 64
    %v349 = vpop.permute.xlu0 %348
    %v351 = vsel %vm226, %v346, 0
    %vm353 = vcmask 1043456
    %v355 = vsel %vm353, %v349, 0
    %357 = vmatprep.subr.bf16.mxu0 0
    %358 = vmatpush1.bf16.msra.mxu0 0
    %359 = vmatprep.subr.bf16.mxu0 0
    %360 = vmatpush1.bf16.msra.mxu0 0
    %361 = vmatprep.subr.bf16.mxu0 0
    %362 = vmatpush1.bf16.msra.mxu0 0
    %363 = vmatprep.subr.bf16.mxu0 0
    %364 = vmatpush1.bf16.msra.mxu0 0
    %365 = vmatprep.subr.bf16.mxu0 0
    %366 = vmatpush1.bf16.msra.mxu0 0
    %367 = vmatprep.subr.bf16.mxu0 0
    %368 = vmatpush1.bf16.msra.mxu0 0
    %369 = vmatprep.subr.bf16.mxu0 0
    %370 = vmatpush1.bf16.msra.mxu0 0
    %371 = vmatprep.subr.bf16.mxu0 0
    %372 = vmatpush1.bf16.msra.mxu0 %v355
    %373 = vmatprep.subr.bf16.mxu0 0
    %374 = vmatpush2.bf16.msra.mxu0 0
    %375 = vmatprep.subr.bf16.mxu0 0
    %376 = vmatpush2.bf16.msra.mxu0 0
    %377 = vmatprep.subr.bf16.mxu0 0
    %378 = vmatpush2.bf16.msra.mxu0 0
    %379 = vmatprep.subr.bf16.mxu0 0
    %380 = vmatpush2.bf16.msra.mxu0 0
    %381 = vmatprep.subr.bf16.mxu0 0
    %382 = vmatpush2.bf16.msra.mxu0 0
    %383 = vmatprep.subr.bf16.mxu0 0
    %384 = vmatpush2.bf16.msra.mxu0 0
    %385 = vmatprep.subr.bf16.mxu0 0
    %386 = vmatpush2.bf16.msra.mxu0 0
    %387 = vmatprep.subr.bf16.mxu0 0
    %388 = vmatpush2.bf16.msra.mxu0 0
    %389 = vmatprep.mubr.bf16.mxu0 0
    %390 = vmatmul.mubr.bf16.gmra.mxu0 %v351
    %v391 = vpop.f32.mrf.mxu0
    %v392 = vadd.f32 0.0, %v391
    %v393 = vpop.f32.mrf.mxu0
    %v394 = vpop.f32.mrf.mxu0
    %v395 = vpop.f32.mrf.mxu0
    %396 = vdwg.mxu0
    %397 = vrot.lane.b32.xlu0 %v183, 64
    %v398 = vpop.permute.xlu0 %397
    %v400 = vsel %vm226, %v347, 0
    %v403 = vsel %vm353, %v398, 0
    %405 = vmatprep.subr.bf16.mxu0 0
    %406 = vmatpush1.bf16.msra.mxu0 0
    %407 = vmatprep.subr.bf16.mxu0 0
    %408 = vmatpush1.bf16.msra.mxu0 0
    %409 = vmatprep.subr.bf16.mxu0 0
    %410 = vmatpush1.bf16.msra.mxu0 0
    %411 = vmatprep.subr.bf16.mxu0 0
    %412 = vmatpush1.bf16.msra.mxu0 0
    %413 = vmatprep.subr.bf16.mxu0 0
    %414 = vmatpush1.bf16.msra.mxu0 0
    %415 = vmatprep.subr.bf16.mxu0 0
    %416 = vmatpush1.bf16.msra.mxu0 0
    %417 = vmatprep.subr.bf16.mxu0 0
    %418 = vmatpush1.bf16.msra.mxu0 0
    %419 = vmatprep.subr.bf16.mxu0 0
    %420 = vmatpush1.bf16.msra.mxu0 %v403
    %421 = vmatprep.subr.bf16.mxu0 0
    %422 = vmatpush2.bf16.msra.mxu0 0
    %423 = vmatprep.subr.bf16.mxu0 0
    %424 = vmatpush2.bf16.msra.mxu0 0
    %425 = vmatprep.subr.bf16.mxu0 0
    %426 = vmatpush2.bf16.msra.mxu0 0
    %427 = vmatprep.subr.bf16.mxu0 0
    %428 = vmatpush2.bf16.msra.mxu0 0
    %429 = vmatprep.subr.bf16.mxu0 0
    %430 = vmatpush2.bf16.msra.mxu0 0
    %431 = vmatprep.subr.bf16.mxu0 0
    %432 = vmatpush2.bf16.msra.mxu0 0
    %433 = vmatprep.subr.bf16.mxu0 0
    %434 = vmatpush2.bf16.msra.mxu0 0
    %435 = vmatprep.subr.bf16.mxu0 0
    %436 = vmatpush2.bf16.msra.mxu0 0
    %437 = vmatprep.mubr.bf16.mxu0 0
    %438 = vmatmul.mubr.bf16.gmra.mxu0 %v400
    %v439 = vpop.f32.mrf.mxu0
    %v440 = vadd.f32 0.0, %v439
    %v441 = vpop.f32.mrf.mxu0
    %v442 = vpop.f32.mrf.mxu0
    %v443 = vpop.f32.mrf.mxu0
    %444 = vdwg.mxu0
    %v447 = vunpack.c.l.s4 1966171168
    %v448 = vunpack.c.0.s8 %v447
    %v449 = vlaneseq
    %v450 = vshrl.u32 %v449, 7
    %v451 = vsub.s32 %v448, %v450
    %v452 = vrot.slane %v187, %v451
    %v453 = vcombine.high %v452, %v452
    %v455 = vunpack.c.l.s4 1966171168
    %v456 = vunpack.c.0.s8 %v455
    %v457 = vlaneseq
    %v458 = vshrl.u32 %v457, 7
    %v459 = vsub.s32 %v456, %v458
    %v460 = vrot.slane %v452, %v459
    %v462 = vunpack.c.l.s4 1966171168
    %v463 = vunpack.c.0.s8 %v462
    %v464 = vlaneseq
    %v465 = vshrl.u32 %v464, 7
    %v466 = vsub.s32 %v463, %v465
    %v467 = vrot.slane %v453, %v466
    %v468 = vlaneseq
    %v469 = vshrl.u32 %v468, 7
    %v470 = vsub.s32 0, %v469
    %v471 = vrot.slane %v460, %v470
    %v472 = vlaneseq
    %v473 = vshrl.u32 %v472, 7
    %v474 = vsub.s32 0, %v473
    %v475 = vrot.slane %v467, %v474
    %478 = vrot.lane.b32.xlu0 %v182, 120
    %v479 = vpop.permute.xlu0 %478
    %480 = vrot.lane.b32.xlu0 %v182, 88
    %v481 = vpop.permute.xlu0 %480
    %v483 = vsel %vm226, %v479, 0
    %v486 = vsel %vm226, %v481, 0
    %488 = vmatprep.subr.bf16.mxu0 0
    %489 = vmatpush1.bf16.xpose.msra.mxu0 0
    %490 = vmatprep.subr.bf16.mxu0 0
    %491 = vmatpush1.bf16.xpose.msra.mxu0 0
    %492 = vmatprep.subr.bf16.mxu0 0
    %493 = vmatpush1.bf16.xpose.msra.mxu0 0
    %494 = vmatprep.subr.bf16.mxu0 0
    %495 = vmatpush1.bf16.xpose.msra.mxu0 0
    %496 = vmatprep.subr.bf16.mxu0 0
    %497 = vmatpush1.bf16.xpose.msra.mxu0 0
    %498 = vmatprep.subr.bf16.mxu0 0
    %499 = vmatpush1.bf16.xpose.msra.mxu0 0
    %500 = vmatprep.subr.bf16.mxu0 0
    %501 = vmatpush1.bf16.xpose.msra.mxu0 0
    %502 = vmatprep.subr.bf16.mxu0 0
    %503 = vmatpush1.bf16.xpose.msra.mxu0 %v486
    %504 = vmatprep.subr.bf16.mxu0 0
    %505 = vmatpush2.bf16.xpose.msra.mxu0 0
    %506 = vmatprep.subr.bf16.mxu0 0
    %507 = vmatpush2.bf16.xpose.msra.mxu0 0
    %508 = vmatprep.subr.bf16.mxu0 0
    %509 = vmatpush2.bf16.xpose.msra.mxu0 0
    %510 = vmatprep.subr.bf16.mxu0 0
    %511 = vmatpush2.bf16.xpose.msra.mxu0 0
    %512 = vmatprep.subr.bf16.mxu0 0
    %513 = vmatpush2.bf16.xpose.msra.mxu0 0
    %514 = vmatprep.subr.bf16.mxu0 0
    %515 = vmatpush2.bf16.xpose.msra.mxu0 0
    %516 = vmatprep.subr.bf16.mxu0 0
    %517 = vmatpush2.bf16.xpose.msra.mxu0 0
    %518 = vmatprep.subr.bf16.mxu0 0
    %519 = vmatpush2.bf16.xpose.msra.mxu0 0
    %520 = vmatprep.mubr.bf16.mxu0 0
    %521 = vmatmul.mubr.bf16.gmra.mxu0 %v483
    %v522 = vpop.f32.mrf.mxu0
    %v523 = vadd.f32 %v471, %v522
    %v524 = vpop.f32.mrf.mxu0
    %v525 = vpop.f32.mrf.mxu0
    %v526 = vpop.f32.mrf.mxu0
    %527 = vdwg.mxu0
    %528 = vrot.lane.b32.xlu0 %v183, 120
    %v529 = vpop.permute.xlu0 %528
    %530 = vrot.lane.b32.xlu0 %v183, 88
    %v531 = vpop.permute.xlu0 %530
    %v533 = vsel %vm226, %v529, 0
    %v536 = vsel %vm226, %v531, 0
    %538 = vmatprep.subr.bf16.mxu0 0
    %539 = vmatpush1.bf16.xpose.msra.mxu0 0
    %540 = vmatprep.subr.bf16.mxu0 0
    %541 = vmatpush1.bf16.xpose.msra.mxu0 0
    %542 = vmatprep.subr.bf16.mxu0 0
    %543 = vmatpush1.bf16.xpose.msra.mxu0 0
    %544 = vmatprep.subr.bf16.mxu0 0
    %545 = vmatpush1.bf16.xpose.msra.mxu0 0
    %546 = vmatprep.subr.bf16.mxu0 0
    %547 = vmatpush1.bf16.xpose.msra.mxu0 0
    %548 = vmatprep.subr.bf16.mxu0 0
    %549 = vmatpush1.bf16.xpose.msra.mxu0 0
    %550 = vmatprep.subr.bf16.mxu0 0
    %551 = vmatpush1.bf16.xpose.msra.mxu0 0
    %552 = vmatprep.subr.bf16.mxu0 0
    %553 = vmatpush1.bf16.xpose.msra.mxu0 %v536
    %554 = vmatprep.subr.bf16.mxu0 0
    %555 = vmatpush2.bf16.xpose.msra.mxu0 0
    %556 = vmatprep.subr.bf16.mxu0 0
    %557 = vmatpush2.bf16.xpose.msra.mxu0 0
    %558 = vmatprep.subr.bf16.mxu0 0
    %559 = vmatpush2.bf16.xpose.msra.mxu0 0
    %560 = vmatprep.subr.bf16.mxu0 0
    %561 = vmatpush2.bf16.xpose.msra.mxu0 0
    %562 = vmatprep.subr.bf16.mxu0 0
    %563 = vmatpush2.bf16.xpose.msra.mxu0 0
    %564 = vmatprep.subr.bf16.mxu0 0
    %565 = vmatpush2.bf16.xpose.msra.mxu0 0
    %566 = vmatprep.subr.bf16.mxu0 0
    %567 = vmatpush2.bf16.xpose.msra.mxu0 0
    %568 = vmatprep.subr.bf16.mxu0 0
    %569 = vmatpush2.bf16.xpose.msra.mxu0 0
    %570 = vmatprep.mubr.bf16.mxu0 0
    %571 = vmatmul.mubr.bf16.gmra.mxu0 %v533
    %v572 = vpop.f32.mrf.mxu0
    %v573 = vadd.f32 %v475, %v572
    %v574 = vpop.f32.mrf.mxu0
    %v575 = vpop.f32.mrf.mxu0
    %v576 = vpop.f32.mrf.mxu0
    %577 = vdwg.mxu0
    %v578 = vadd.f32 %v523, %v184
    %v579 = vadd.f32 %v573, %v185
    %v580 = vsel %vm226, %v578, -inf
    %581 = vmax.xlane.f32.xlu0 %v580
    %v582 = vpop.xlane.xlu0 %581
    %v583 = vsel %vm226, %v579, -inf
    %584 = vmax.xlane.f32.xlu0 %v583
    %v585 = vpop.xlane.xlu0 %584
    %v586 = vsub.f32 %v578, %v582
    %v587 = vsub.f32 %v579, %v585
    %v588 = vmul.f32 %v586, 1.442695
    %v589 = vpow.pop %v588
    %v590 = vmul.f32 %v587, 1.442695
    %v591 = vpow.pop %v590
    %v592 = vsel %vm226, %v589, 0.0
    %593 = vadd.xlane.f32.xlu0 %v592
    %v594 = vpop.xlane.xlu0 %593
    %v595 = vsel %vm226, %v591, 0.0
    %596 = vadd.xlane.f32.xlu0 %v595
    %v597 = vpop.xlane.xlu0 %596
    %v598 = vrcp.pop %v594
    %v599 = vrcp.pop %v597
    %v600 = vmul.f32 %v589, %v598
    %v601 = vmul.f32 %v591, %v599
    %v602 = vpack.c.bf16 %v600, %v600
    %v603 = vpack.c.bf16 %v601, %v601
    %604 = vrot.lane.b32.xlu0 %v182, 56
    %v605 = vpop.permute.xlu0 %604
    %v607 = vsel %vm226, %v602, 0
    %v610 = vsel %vm353, %v605, 0
    %612 = vmatprep.subr.bf16.mxu0 0
    %613 = vmatpush1.bf16.msra.mxu0 0
    %614 = vmatprep.subr.bf16.mxu0 0
    %615 = vmatpush1.bf16.msra.mxu0 0
    %616 = vmatprep.subr.bf16.mxu0 0
    %617 = vmatpush1.bf16.msra.mxu0 0
    %618 = vmatprep.subr.bf16.mxu0 0
    %619 = vmatpush1.bf16.msra.mxu0 0
    %620 = vmatprep.subr.bf16.mxu0 0
    %621 = vmatpush1.bf16.msra.mxu0 0
    %622 = vmatprep.subr.bf16.mxu0 0
    %623 = vmatpush1.bf16.msra.mxu0 0
    %624 = vmatprep.subr.bf16.mxu0 0
    %625 = vmatpush1.bf16.msra.mxu0 0
    %626 = vmatprep.subr.bf16.mxu0 0
    %627 = vmatpush1.bf16.msra.mxu0 %v610
    %628 = vmatprep.subr.bf16.mxu0 0
    %629 = vmatpush2.bf16.msra.mxu0 0
    %630 = vmatprep.subr.bf16.mxu0 0
    %631 = vmatpush2.bf16.msra.mxu0 0
    %632 = vmatprep.subr.bf16.mxu0 0
    %633 = vmatpush2.bf16.msra.mxu0 0
    %634 = vmatprep.subr.bf16.mxu0 0
    %635 = vmatpush2.bf16.msra.mxu0 0
    %636 = vmatprep.subr.bf16.mxu0 0
    %637 = vmatpush2.bf16.msra.mxu0 0
    %638 = vmatprep.subr.bf16.mxu0 0
    %639 = vmatpush2.bf16.msra.mxu0 0
    %640 = vmatprep.subr.bf16.mxu0 0
    %641 = vmatpush2.bf16.msra.mxu0 0
    %642 = vmatprep.subr.bf16.mxu0 0
    %643 = vmatpush2.bf16.msra.mxu0 0
    %644 = vmatprep.mubr.bf16.mxu0 0
    %645 = vmatmul.mubr.bf16.gmra.mxu0 %v607
    %v646 = vpop.f32.mrf.mxu0
    %v647 = vadd.f32 0.0, %v646
    %v648 = vpop.f32.mrf.mxu0
    %v649 = vpop.f32.mrf.mxu0
    %v650 = vpop.f32.mrf.mxu0
    %651 = vdwg.mxu0
    %652 = vrot.lane.b32.xlu0 %v183, 56
    %v653 = vpop.permute.xlu0 %652
    %v655 = vsel %vm226, %v603, 0
    %v658 = vsel %vm353, %v653, 0
    %660 = vmatprep.subr.bf16.mxu0 0
    %661 = vmatpush1.bf16.msra.mxu0 0
    %662 = vmatprep.subr.bf16.mxu0 0
    %663 = vmatpush1.bf16.msra.mxu0 0
    %664 = vmatprep.subr.bf16.mxu0 0
    %665 = vmatpush1.bf16.msra.mxu0 0
    %666 = vmatprep.subr.bf16.mxu0 0
    %667 = vmatpush1.bf16.msra.mxu0 0
    %668 = vmatprep.subr.bf16.mxu0 0
    %669 = vmatpush1.bf16.msra.mxu0 0
    %670 = vmatprep.subr.bf16.mxu0 0
    %671 = vmatpush1.bf16.msra.mxu0 0
    %672 = vmatprep.subr.bf16.mxu0 0
    %673 = vmatpush1.bf16.msra.mxu0 0
    %674 = vmatprep.subr.bf16.mxu0 0
    %675 = vmatpush1.bf16.msra.mxu0 %v658
    %676 = vmatprep.subr.bf16.mxu0 0
    %677 = vmatpush2.bf16.msra.mxu0 0
    %678 = vmatprep.subr.bf16.mxu0 0
    %679 = vmatpush2.bf16.msra.mxu0 0
    %680 = vmatprep.subr.bf16.mxu0 0
    %681 = vmatpush2.bf16.msra.mxu0 0
    %682 = vmatprep.subr.bf16.mxu0 0
    %683 = vmatpush2.bf16.msra.mxu0 0
    %684 = vmatprep.subr.bf16.mxu0 0
    %685 = vmatpush2.bf16.msra.mxu0 0
    %686 = vmatprep.subr.bf16.mxu0 0
    %687 = vmatpush2.bf16.msra.mxu0 0
    %688 = vmatprep.subr.bf16.mxu0 0
    %689 = vmatpush2.bf16.msra.mxu0 0
    %690 = vmatprep.subr.bf16.mxu0 0
    %691 = vmatpush2.bf16.msra.mxu0 0
    %692 = vmatprep.mubr.bf16.mxu0 0
    %693 = vmatmul.mubr.bf16.gmra.mxu0 %v655
    %v694 = vpop.f32.mrf.mxu0
    %v695 = vadd.f32 0.0, %v694
    %v696 = vpop.f32.mrf.mxu0
    %v697 = vpop.f32.mrf.mxu0
    %v698 = vpop.f32.mrf.mxu0
    %699 = vdwg.mxu0
    %v702 = vunpack.c.l.s4 1966171168
    %v703 = vunpack.c.0.s8 %v702
    %v704 = vlaneseq
    %v705 = vshrl.u32 %v704, 7
    %v706 = vsub.s32 %v703, %v705
    %v707 = vrot.slane %v188, %v706
    %v708 = vcombine.high %v707, %v707
    %v710 = vunpack.c.l.s4 1966171168
    %v711 = vunpack.c.0.s8 %v710
    %v712 = vlaneseq
    %v713 = vshrl.u32 %v712, 7
    %v714 = vsub.s32 %v711, %v713
    %v715 = vrot.slane %v707, %v714
    %v717 = vunpack.c.l.s4 1966171168
    %v718 = vunpack.c.0.s8 %v717
    %v719 = vlaneseq
    %v720 = vshrl.u32 %v719, 7
    %v721 = vsub.s32 %v718, %v720
    %v722 = vrot.slane %v708, %v721
    %v723 = vlaneseq
    %v724 = vshrl.u32 %v723, 7
    %v725 = vsub.s32 0, %v724
    %v726 = vrot.slane %v715, %v725
    %v727 = vlaneseq
    %v728 = vshrl.u32 %v727, 7
    %v729 = vsub.s32 0, %v728
    %v730 = vrot.slane %v722, %v729
    %733 = vrot.lane.b32.xlu0 %v182, 112
    %v734 = vpop.permute.xlu0 %733
    %735 = vrot.lane.b32.xlu0 %v182, 80
    %v736 = vpop.permute.xlu0 %735
    %v738 = vsel %vm226, %v734, 0
    %v741 = vsel %vm226, %v736, 0
    %743 = vmatprep.subr.bf16.mxu0 0
    %744 = vmatpush1.bf16.xpose.msra.mxu0 0
    %745 = vmatprep.subr.bf16.mxu0 0
    %746 = vmatpush1.bf16.xpose.msra.mxu0 0
    %747 = vmatprep.subr.bf16.mxu0 0
    %748 = vmatpush1.bf16.xpose.msra.mxu0 0
    %749 = vmatprep.subr.bf16.mxu0 0
    %750 = vmatpush1.bf16.xpose.msra.mxu0 0
    %751 = vmatprep.subr.bf16.mxu0 0
    %752 = vmatpush1.bf16.xpose.msra.mxu0 0
    %753 = vmatprep.subr.bf16.mxu0 0
    %754 = vmatpush1.bf16.xpose.msra.mxu0 0
    %755 = vmatprep.subr.bf16.mxu0 0
    %756 = vmatpush1.bf16.xpose.msra.mxu0 0
    %757 = vmatprep.subr.bf16.mxu0 0
    %758 = vmatpush1.bf16.xpose.msra.mxu0 %v741
    %759 = vmatprep.subr.bf16.mxu0 0
    %760 = vmatpush2.bf16.xpose.msra.mxu0 0
    %761 = vmatprep.subr.bf16.mxu0 0
    %762 = vmatpush2.bf16.xpose.msra.mxu0 0
    %763 = vmatprep.subr.bf16.mxu0 0
    %764 = vmatpush2.bf16.xpose.msra.mxu0 0
    %765 = vmatprep.subr.bf16.mxu0 0
    %766 = vmatpush2.bf16.xpose.msra.mxu0 0
    %767 = vmatprep.subr.bf16.mxu0 0
    %768 = vmatpush2.bf16.xpose.msra.mxu0 0
    %769 = vmatprep.subr.bf16.mxu0 0
    %770 = vmatpush2.bf16.xpose.msra.mxu0 0
    %771 = vmatprep.subr.bf16.mxu0 0
    %772 = vmatpush2.bf16.xpose.msra.mxu0 0
    %773 = vmatprep.subr.bf16.mxu0 0
    %774 = vmatpush2.bf16.xpose.msra.mxu0 0
    %775 = vmatprep.mubr.bf16.mxu0 0
    %776 = vmatmul.mubr.bf16.gmra.mxu0 %v738
    %v777 = vpop.f32.mrf.mxu0
    %v778 = vadd.f32 %v726, %v777
    %v779 = vpop.f32.mrf.mxu0
    %v780 = vpop.f32.mrf.mxu0
    %v781 = vpop.f32.mrf.mxu0
    %782 = vdwg.mxu0
    %783 = vrot.lane.b32.xlu0 %v183, 112
    %v784 = vpop.permute.xlu0 %783
    %785 = vrot.lane.b32.xlu0 %v183, 80
    %v786 = vpop.permute.xlu0 %785
    %v788 = vsel %vm226, %v784, 0
    %v791 = vsel %vm226, %v786, 0
    %793 = vmatprep.subr.bf16.mxu0 0
    %794 = vmatpush1.bf16.xpose.msra.mxu0 0
    %795 = vmatprep.subr.bf16.mxu0 0
    %796 = vmatpush1.bf16.xpose.msra.mxu0 0
    %797 = vmatprep.subr.bf16.mxu0 0
    %798 = vmatpush1.bf16.xpose.msra.mxu0 0
    %799 = vmatprep.subr.bf16.mxu0 0
    %800 = vmatpush1.bf16.xpose.msra.mxu0 0
    %801 = vmatprep.subr.bf16.mxu0 0
    %802 = vmatpush1.bf16.xpose.msra.mxu0 0
    %803 = vmatprep.subr.bf16.mxu0 0
    %804 = vmatpush1.bf16.xpose.msra.mxu0 0
    %805 = vmatprep.subr.bf16.mxu0 0
    %806 = vmatpush1.bf16.xpose.msra.mxu0 0
    %807 = vmatprep.subr.bf16.mxu0 0
    %808 = vmatpush1.bf16.xpose.msra.mxu0 %v791
    %809 = vmatprep.subr.bf16.mxu0 0
    %810 = vmatpush2.bf16.xpose.msra.mxu0 0
    %811 = vmatprep.subr.bf16.mxu0 0
    %812 = vmatpush2.bf16.xpose.msra.mxu0 0
    %813 = vmatprep.subr.bf16.mxu0 0
    %814 = vmatpush2.bf16.xpose.msra.mxu0 0
    %815 = vmatprep.subr.bf16.mxu0 0
    %816 = vmatpush2.bf16.xpose.msra.mxu0 0
    %817 = vmatprep.subr.bf16.mxu0 0
    %818 = vmatpush2.bf16.xpose.msra.mxu0 0
    %819 = vmatprep.subr.bf16.mxu0 0
    %820 = vmatpush2.bf16.xpose.msra.mxu0 0
    %821 = vmatprep.subr.bf16.mxu0 0
    %822 = vmatpush2.bf16.xpose.msra.mxu0 0
    %823 = vmatprep.subr.bf16.mxu0 0
    %824 = vmatpush2.bf16.xpose.msra.mxu0 0
    %825 = vmatprep.mubr.bf16.mxu0 0
    %826 = vmatmul.mubr.bf16.gmra.mxu0 %v788
    %v827 = vpop.f32.mrf.mxu0
    %v828 = vadd.f32 %v730, %v827
    %v829 = vpop.f32.mrf.mxu0
    %v830 = vpop.f32.mrf.mxu0
    %v831 = vpop.f32.mrf.mxu0
    %832 = vdwg.mxu0
    %v833 = vadd.f32 %v778, %v184
    %v834 = vadd.f32 %v828, %v185
    %v835 = vsel %vm226, %v833, -inf
    %836 = vmax.xlane.f32.xlu0 %v835
    %v837 = vpop.xlane.xlu0 %836
    %v838 = vsel %vm226, %v834, -inf
    %839 = vmax.xlane.f32.xlu0 %v838
    %v840 = vpop.xlane.xlu0 %839
    %v841 = vsub.f32 %v833, %v837
    %v842 = vsub.f32 %v834, %v840
    %v843 = vmul.f32 %v841, 1.442695
    %v844 = vpow.pop %v843
    %v845 = vmul.f32 %v842, 1.442695
    %v846 = vpow.pop %v845
    %v847 = vsel %vm226, %v844, 0.0
    %848 = vadd.xlane.f32.xlu0 %v847
    %v849 = vpop.xlane.xlu0 %848
    %v850 = vsel %vm226, %v846, 0.0
    %851 = vadd.xlane.f32.xlu0 %v850
    %v852 = vpop.xlane.xlu0 %851
    %v853 = vrcp.pop %v849
    %v854 = vrcp.pop %v852
    %v855 = vmul.f32 %v844, %v853
    %v856 = vmul.f32 %v846, %v854
    %v857 = vpack.c.bf16 %v855, %v855
    %v858 = vpack.c.bf16 %v856, %v856
    %859 = vrot.lane.b32.xlu0 %v182, 48
    %v860 = vpop.permute.xlu0 %859
    %v862 = vsel %vm226, %v857, 0
    %v865 = vsel %vm353, %v860, 0
    %867 = vmatprep.subr.bf16.mxu0 0
    %868 = vmatpush1.bf16.msra.mxu0 0
    %869 = vmatprep.subr.bf16.mxu0 0
    %870 = vmatpush1.bf16.msra.mxu0 0
    %871 = vmatprep.subr.bf16.mxu0 0
    %872 = vmatpush1.bf16.msra.mxu0 0
    %873 = vmatprep.subr.bf16.mxu0 0
    %874 = vmatpush1.bf16.msra.mxu0 0
    %875 = vmatprep.subr.bf16.mxu0 0
    %876 = vmatpush1.bf16.msra.mxu0 0
    %877 = vmatprep.subr.bf16.mxu0 0
    %878 = vmatpush1.bf16.msra.mxu0 0
    %879 = vmatprep.subr.bf16.mxu0 0
    %880 = vmatpush1.bf16.msra.mxu0 0
    %881 = vmatprep.subr.bf16.mxu0 0
    %882 = vmatpush1.bf16.msra.mxu0 %v865
    %883 = vmatprep.subr.bf16.mxu0 0
    %884 = vmatpush2.bf16.msra.mxu0 0
    %885 = vmatprep.subr.bf16.mxu0 0
    %886 = vmatpush2.bf16.msra.mxu0 0
    %887 = vmatprep.subr.bf16.mxu0 0
    %888 = vmatpush2.bf16.msra.mxu0 0
    %889 = vmatprep.subr.bf16.mxu0 0
    %890 = vmatpush2.bf16.msra.mxu0 0
    %891 = vmatprep.subr.bf16.mxu0 0
    %892 = vmatpush2.bf16.msra.mxu0 0
    %893 = vmatprep.subr.bf16.mxu0 0
    %894 = vmatpush2.bf16.msra.mxu0 0
    %895 = vmatprep.subr.bf16.mxu0 0
    %896 = vmatpush2.bf16.msra.mxu0 0
    %897 = vmatprep.subr.bf16.mxu0 0
    %898 = vmatpush2.bf16.msra.mxu0 0
    %899 = vmatprep.mubr.bf16.mxu0 0
    %900 = vmatmul.mubr.bf16.gmra.mxu0 %v862
    %v901 = vpop.f32.mrf.mxu0
    %v902 = vadd.f32 0.0, %v901
    %v903 = vpop.f32.mrf.mxu0
    %v904 = vpop.f32.mrf.mxu0
    %v905 = vpop.f32.mrf.mxu0
    %906 = vdwg.mxu0
    %907 = vrot.lane.b32.xlu0 %v183, 48
    %v908 = vpop.permute.xlu0 %907
    %v910 = vsel %vm226, %v858, 0
    %v913 = vsel %vm353, %v908, 0
    %915 = vmatprep.subr.bf16.mxu0 0
    %916 = vmatpush1.bf16.msra.mxu0 0
    %917 = vmatprep.subr.bf16.mxu0 0
    %918 = vmatpush1.bf16.msra.mxu0 0
    %919 = vmatprep.subr.bf16.mxu0 0
    %920 = vmatpush1.bf16.msra.mxu0 0
    %921 = vmatprep.subr.bf16.mxu0 0
    %922 = vmatpush1.bf16.msra.mxu0 0
    %923 = vmatprep.subr.bf16.mxu0 0
    %924 = vmatpush1.bf16.msra.mxu0 0
    %925 = vmatprep.subr.bf16.mxu0 0
    %926 = vmatpush1.bf16.msra.mxu0 0
    %927 = vmatprep.subr.bf16.mxu0 0
    %928 = vmatpush1.bf16.msra.mxu0 0
    %929 = vmatprep.subr.bf16.mxu0 0
    %930 = vmatpush1.bf16.msra.mxu0 %v913
    %931 = vmatprep.subr.bf16.mxu0 0
    %932 = vmatpush2.bf16.msra.mxu0 0
    %933 = vmatprep.subr.bf16.mxu0 0
    %934 = vmatpush2.bf16.msra.mxu0 0
    %935 = vmatprep.subr.bf16.mxu0 0
    %936 = vmatpush2.bf16.msra.mxu0 0
    %937 = vmatprep.subr.bf16.mxu0 0
    %938 = vmatpush2.bf16.msra.mxu0 0
    %939 = vmatprep.subr.bf16.mxu0 0
    %940 = vmatpush2.bf16.msra.mxu0 0
    %941 = vmatprep.subr.bf16.mxu0 0
    %942 = vmatpush2.bf16.msra.mxu0 0
    %943 = vmatprep.subr.bf16.mxu0 0
    %944 = vmatpush2.bf16.msra.mxu0 0
    %945 = vmatprep.subr.bf16.mxu0 0
    %946 = vmatpush2.bf16.msra.mxu0 0
    %947 = vmatprep.mubr.bf16.mxu0 0
    %948 = vmatmul.mubr.bf16.gmra.mxu0 %v910
    %v949 = vpop.f32.mrf.mxu0
    %v950 = vadd.f32 0.0, %v949
    %v951 = vpop.f32.mrf.mxu0
    %v952 = vpop.f32.mrf.mxu0
    %v953 = vpop.f32.mrf.mxu0
    %954 = vdwg.mxu0
    %v957 = vunpack.c.l.s4 1966171168
    %v958 = vunpack.c.0.s8 %v957
    %v959 = vlaneseq
    %v960 = vshrl.u32 %v959, 7
    %v961 = vsub.s32 %v958, %v960
    %v962 = vrot.slane %v189, %v961
    %v963 = vcombine.high %v962, %v962
    %v965 = vunpack.c.l.s4 1966171168
    %v966 = vunpack.c.0.s8 %v965
    %v967 = vlaneseq
    %v968 = vshrl.u32 %v967, 7
    %v969 = vsub.s32 %v966, %v968
    %v970 = vrot.slane %v962, %v969
    %v972 = vunpack.c.l.s4 1966171168
    %v973 = vunpack.c.0.s8 %v972
    %v974 = vlaneseq
    %v975 = vshrl.u32 %v974, 7
    %v976 = vsub.s32 %v973, %v975
    %v977 = vrot.slane %v963, %v976
    %v978 = vlaneseq
    %v979 = vshrl.u32 %v978, 7
    %v980 = vsub.s32 0, %v979
    %v981 = vrot.slane %v970, %v980
    %v982 = vlaneseq
    %v983 = vshrl.u32 %v982, 7
    %v984 = vsub.s32 0, %v983
    %v985 = vrot.slane %v977, %v984
    %988 = vrot.lane.b32.xlu0 %v182, 104
    %v989 = vpop.permute.xlu0 %988
    %990 = vrot.lane.b32.xlu0 %v182, 72
    %v991 = vpop.permute.xlu0 %990
    %v993 = vsel %vm226, %v989, 0
    %v996 = vsel %vm226, %v991, 0
    %998 = vmatprep.subr.bf16.mxu0 0
    %999 = vmatpush1.bf16.xpose.msra.mxu0 0
    %1000 = vmatprep.subr.bf16.mxu0 0
    %1001 = vmatpush1.bf16.xpose.msra.mxu0 0
    %1002 = vmatprep.subr.bf16.mxu0 0
    %1003 = vmatpush1.bf16.xpose.msra.mxu0 0
    %1004 = vmatprep.subr.bf16.mxu0 0
    %1005 = vmatpush1.bf16.xpose.msra.mxu0 0
    %1006 = vmatprep.subr.bf16.mxu0 0
    %1007 = vmatpush1.bf16.xpose.msra.mxu0 0
    %1008 = vmatprep.subr.bf16.mxu0 0
    %1009 = vmatpush1.bf16.xpose.msra.mxu0 0
    %1010 = vmatprep.subr.bf16.mxu0 0
    %1011 = vmatpush1.bf16.xpose.msra.mxu0 0
    %1012 = vmatprep.subr.bf16.mxu0 0
    %1013 = vmatpush1.bf16.xpose.msra.mxu0 %v996
    %1014 = vmatprep.subr.bf16.mxu0 0
    %1015 = vmatpush2.bf16.xpose.msra.mxu0 0
    %1016 = vmatprep.subr.bf16.mxu0 0
    %1017 = vmatpush2.bf16.xpose.msra.mxu0 0
    %1018 = vmatprep.subr.bf16.mxu0 0
    %1019 = vmatpush2.bf16.xpose.msra.mxu0 0
    %1020 = vmatprep.subr.bf16.mxu0 0
    %1021 = vmatpush2.bf16.xpose.msra.mxu0 0
    %1022 = vmatprep.subr.bf16.mxu0 0
    %1023 = vmatpush2.bf16.xpose.msra.mxu0 0
    %1024 = vmatprep.subr.bf16.mxu0 0
    %1025 = vmatpush2.bf16.xpose.msra.mxu0 0
    %1026 = vmatprep.subr.bf16.mxu0 0
    %1027 = vmatpush2.bf16.xpose.msra.mxu0 0
    %1028 = vmatprep.subr.bf16.mxu0 0
    %1029 = vmatpush2.bf16.xpose.msra.mxu0 0
    %1030 = vmatprep.mubr.bf16.mxu0 0
    %1031 = vmatmul.mubr.bf16.gmra.mxu0 %v993
    %v1032 = vpop.f32.mrf.mxu0
    %v1033 = vadd.f32 %v981, %v1032
    %v1034 = vpop.f32.mrf.mxu0
    %v1035 = vpop.f32.mrf.mxu0
    %v1036 = vpop.f32.mrf.mxu0
    %1037 = vdwg.mxu0
    %1038 = vrot.lane.b32.xlu0 %v183, 104
    %v1039 = vpop.permute.xlu0 %1038
    %1040 = vrot.lane.b32.xlu0 %v183, 72
    %v1041 = vpop.permute.xlu0 %1040
    %v1043 = vsel %vm226, %v1039, 0
    %v1046 = vsel %vm226, %v1041, 0
    %1048 = vmatprep.subr.bf16.mxu0 0
    %1049 = vmatpush1.bf16.xpose.msra.mxu0 0
    %1050 = vmatprep.subr.bf16.mxu0 0
    %1051 = vmatpush1.bf16.xpose.msra.mxu0 0
    %1052 = vmatprep.subr.bf16.mxu0 0
    %1053 = vmatpush1.bf16.xpose.msra.mxu0 0
    %1054 = vmatprep.subr.bf16.mxu0 0
    %1055 = vmatpush1.bf16.xpose.msra.mxu0 0
    %1056 = vmatprep.subr.bf16.mxu0 0
    %1057 = vmatpush1.bf16.xpose.msra.mxu0 0
    %1058 = vmatprep.subr.bf16.mxu0 0
    %1059 = vmatpush1.bf16.xpose.msra.mxu0 0
    %1060 = vmatprep.subr.bf16.mxu0 0
    %1061 = vmatpush1.bf16.xpose.msra.mxu0 0
    %1062 = vmatprep.subr.bf16.mxu0 0
    %1063 = vmatpush1.bf16.xpose.msra.mxu0 %v1046
    %1064 = vmatprep.subr.bf16.mxu0 0
    %1065 = vmatpush2.bf16.xpose.msra.mxu0 0
    %1066 = vmatprep.subr.bf16.mxu0 0
    %1067 = vmatpush2.bf16.xpose.msra.mxu0 0
    %1068 = vmatprep.subr.bf16.mxu0 0
    %1069 = vmatpush2.bf16.xpose.msra.mxu0 0
    %1070 = vmatprep.subr.bf16.mxu0 0
    %1071 = vmatpush2.bf16.xpose.msra.mxu0 0
    %1072 = vmatprep.subr.bf16.mxu0 0
    %1073 = vmatpush2.bf16.xpose.msra.mxu0 0
    %1074 = vmatprep.subr.bf16.mxu0 0
    %1075 = vmatpush2.bf16.xpose.msra.mxu0 0
    %1076 = vmatprep.subr.bf16.mxu0 0
    %1077 = vmatpush2.bf16.xpose.msra.mxu0 0
    %1078 = vmatprep.subr.bf16.mxu0 0
    %1079 = vmatpush2.bf16.xpose.msra.mxu0 0
    %1080 = vmatprep.mubr.bf16.mxu0 0
    %1081 = vmatmul.mubr.bf16.gmra.mxu0 %v1043
    %v1082 = vpop.f32.mrf.mxu0
    %v1083 = vadd.f32 %v985, %v1082
    %v1084 = vpop.f32.mrf.mxu0
    %v1085 = vpop.f32.mrf.mxu0
    %v1086 = vpop.f32.mrf.mxu0
    %1087 = vdwg.mxu0
    %v1088 = vadd.f32 %v1033, %v184
    %v1089 = vadd.f32 %v1083, %v185
    %v1090 = vsel %vm226, %v1088, -inf
    %1091 = vmax.xlane.f32.xlu0 %v1090
    %v1092 = vpop.xlane.xlu0 %1091
    %v1093 = vsel %vm226, %v1089, -inf
    %1094 = vmax.xlane.f32.xlu0 %v1093
    %v1095 = vpop.xlane.xlu0 %1094
    %v1096 = vsub.f32 %v1088, %v1092
    %v1097 = vsub.f32 %v1089, %v1095
    %v1098 = vmul.f32 %v1096, 1.442695
    %v1099 = vpow.pop %v1098
    %v1100 = vmul.f32 %v1097, 1.442695
    %v1101 = vpow.pop %v1100
    %v1102 = vsel %vm226, %v1099, 0.0
    %1103 = vadd.xlane.f32.xlu0 %v1102
    %v1104 = vpop.xlane.xlu0 %1103
    %v1105 = vsel %vm226, %v1101, 0.0
    %1106 = vadd.xlane.f32.xlu0 %v1105
    %v1107 = vpop.xlane.xlu0 %1106
    %v1108 = vrcp.pop %v1104
    %v1109 = vrcp.pop %v1107
    %v1110 = vmul.f32 %v1099, %v1108
    %v1111 = vmul.f32 %v1101, %v1109
    %v1112 = vpack.c.bf16 %v1110, %v1110
    %v1113 = vpack.c.bf16 %v1111, %v1111
    %1114 = vrot.lane.b32.xlu0 %v182, 40
    %v1115 = vpop.permute.xlu0 %1114
    %v1117 = vsel %vm226, %v1112, 0
    %v1120 = vsel %vm353, %v1115, 0
    %1122 = vmatprep.subr.bf16.mxu0 0
    %1123 = vmatpush1.bf16.msra.mxu0 0
    %1124 = vmatprep.subr.bf16.mxu0 0
    %1125 = vmatpush1.bf16.msra.mxu0 0
    %1126 = vmatprep.subr.bf16.mxu0 0
    %1127 = vmatpush1.bf16.msra.mxu0 0
    %1128 = vmatprep.subr.bf16.mxu0 0
    %1129 = vmatpush1.bf16.msra.mxu0 0
    %1130 = vmatprep.subr.bf16.mxu0 0
    %1131 = vmatpush1.bf16.msra.mxu0 0
    %1132 = vmatprep.subr.bf16.mxu0 0
    %1133 = vmatpush1.bf16.msra.mxu0 0
    %1134 = vmatprep.subr.bf16.mxu0 0
    %1135 = vmatpush1.bf16.msra.mxu0 0
    %1136 = vmatprep.subr.bf16.mxu0 0
    %1137 = vmatpush1.bf16.msra.mxu0 %v1120
    %1138 = vmatprep.subr.bf16.mxu0 0
    %1139 = vmatpush2.bf16.msra.mxu0 0
    %1140 = vmatprep.subr.bf16.mxu0 0
    %1141 = vmatpush2.bf16.msra.mxu0 0
    %1142 = vmatprep.subr.bf16.mxu0 0
    %1143 = vmatpush2.bf16.msra.mxu0 0
    %1144 = vmatprep.subr.bf16.mxu0 0
    %1145 = vmatpush2.bf16.msra.mxu0 0
    %1146 = vmatprep.subr.bf16.mxu0 0
    %1147 = vmatpush2.bf16.msra.mxu0 0
    %1148 = vmatprep.subr.bf16.mxu0 0
    %1149 = vmatpush2.bf16.msra.mxu0 0
    %1150 = vmatprep.subr.bf16.mxu0 0
    %1151 = vmatpush2.bf16.msra.mxu0 0
    %1152 = vmatprep.subr.bf16.mxu0 0
    %1153 = vmatpush2.bf16.msra.mxu0 0
    %1154 = vmatprep.mubr.bf16.mxu0 0
    %1155 = vmatmul.mubr.bf16.gmra.mxu0 %v1117
    %v1156 = vpop.f32.mrf.mxu0
    %v1157 = vadd.f32 0.0, %v1156
    %v1158 = vpop.f32.mrf.mxu0
    %v1159 = vpop.f32.mrf.mxu0
    %v1160 = vpop.f32.mrf.mxu0
    %1161 = vdwg.mxu0
    %1162 = vrot.lane.b32.xlu0 %v183, 40
    %v1163 = vpop.permute.xlu0 %1162
    %v1165 = vsel %vm226, %v1113, 0
    %v1168 = vsel %vm353, %v1163, 0
    %1170 = vmatprep.subr.bf16.mxu0 0
    %1171 = vmatpush1.bf16.msra.mxu0 0
    %1172 = vmatprep.subr.bf16.mxu0 0
    %1173 = vmatpush1.bf16.msra.mxu0 0
    %1174 = vmatprep.subr.bf16.mxu0 0
    %1175 = vmatpush1.bf16.msra.mxu0 0
    %1176 = vmatprep.subr.bf16.mxu0 0
    %1177 = vmatpush1.bf16.msra.mxu0 0
    %1178 = vmatprep.subr.bf16.mxu0 0
    %1179 = vmatpush1.bf16.msra.mxu0 0
    %1180 = vmatprep.subr.bf16.mxu0 0
    %1181 = vmatpush1.bf16.msra.mxu0 0
    %1182 = vmatprep.subr.bf16.mxu0 0
    %1183 = vmatpush1.bf16.msra.mxu0 0
    %1184 = vmatprep.subr.bf16.mxu0 0
    %1185 = vmatpush1.bf16.msra.mxu0 %v1168
    %1186 = vmatprep.subr.bf16.mxu0 0
    %1187 = vmatpush2.bf16.msra.mxu0 0
    %1188 = vmatprep.subr.bf16.mxu0 0
    %1189 = vmatpush2.bf16.msra.mxu0 0
    %1190 = vmatprep.subr.bf16.mxu0 0
    %1191 = vmatpush2.bf16.msra.mxu0 0
    %1192 = vmatprep.subr.bf16.mxu0 0
    %1193 = vmatpush2.bf16.msra.mxu0 0
    %1194 = vmatprep.subr.bf16.mxu0 0
    %1195 = vmatpush2.bf16.msra.mxu0 0
    %1196 = vmatprep.subr.bf16.mxu0 0
    %1197 = vmatpush2.bf16.msra.mxu0 0
    %1198 = vmatprep.subr.bf16.mxu0 0
    %1199 = vmatpush2.bf16.msra.mxu0 0
    %1200 = vmatprep.subr.bf16.mxu0 0
    %1201 = vmatpush2.bf16.msra.mxu0 0
    %1202 = vmatprep.mubr.bf16.mxu0 0
    %1203 = vmatmul.mubr.bf16.gmra.mxu0 %v1165
    %v1204 = vpop.f32.mrf.mxu0
    %v1205 = vadd.f32 0.0, %v1204
    %v1206 = vpop.f32.mrf.mxu0
    %v1207 = vpop.f32.mrf.mxu0
    %v1208 = vpop.f32.mrf.mxu0
    %1209 = vdwg.mxu0
    %1212 = vrot.lane.b32.xlu0 %v647, 8
    %v1213 = vpop.permute.xlu0 %1212
    %1214 = vrot.lane.b32.xlu0 %v695, 8
    %v1215 = vpop.permute.xlu0 %1214
    %1220 = vrot.lane.b32.xlu0 %v902, 16
    %v1221 = vpop.permute.xlu0 %1220
    %1222 = vrot.lane.b32.xlu0 %v950, 16
    %v1223 = vpop.permute.xlu0 %1222
    %1228 = vrot.lane.b32.xlu0 %v1157, 24
    %v1229 = vpop.permute.xlu0 %1228
    %1230 = vrot.lane.b32.xlu0 %v1205, 24
    %v1231 = vpop.permute.xlu0 %1230
    %v1234 = vsel %vm226, %v392, %v1213
    %v1235 = vsel %vm226, %v440, %v1215
    %vm1236 = vcmask 130048
    %v1237 = vsel %vm1236, %v1234, %v1221
    %v1238 = vsel %vm1236, %v1235, %v1223
    %vm1239 = vcmask 195584
    %v1240 = vsel %vm1239, %v1237, %v1229
    %v1241 = vsel %vm1239, %v1238, %v1231
    %v1242 = vpack.c.bf16 %v1241, %v1240
    %v1243 = vld [vmem:[%s7] sm:$0xf]
    %v1244 = vld [vmem:[%s7 + $0x4] sm:$0xf]
    %v1245 = vld [vmem:[%s7 + $0x8] sm:$0xf]
    %v1246 = vld [vmem:[%s7 + $0xc] sm:$0xf]
    %v1247 = vld [vmem:[%s8] sm:$0x1]
    %v1249 = vlaneseq
    %v1250 = vshrl.u32 %v1249, 7
    %v1251 = vsub.s32 0, %v1250
    %v1252 = vrot.slane %v1247, %v1251
    %v1258 = vunpack.c.l.b16 %v1243
    %v1259 = vunpack.c.l.b16 %v1244
    %v1260 = vunpack.c.l.b16 %v1245
    %v1261 = vunpack.c.l.b16 %v1246
    %v1262 = vpack.c.b16 %v1259, %v1258
    %v1263 = vpack.c.b16 %v1261, %v1260
    %v1267 = vsel %vm70, %v1242, 0
    %1269 = vmatprep.subr.bf16.mxu0 0
    %1270 = vmatpush1.bf16.msra.mxu0 0
    %1271 = vmatprep.subr.bf16.mxu0 0
    %1272 = vmatpush1.bf16.msra.mxu0 0
    %1273 = vmatprep.subr.bf16.mxu0 0
    %1274 = vmatpush1.bf16.msra.mxu0 0
    %1275 = vmatprep.subr.bf16.mxu0 0
    %1276 = vmatpush1.bf16.msra.mxu0 0
    %1277 = vmatprep.subr.bf16.mxu0 0
    %1278 = vmatpush1.bf16.msra.mxu0 0
    %1279 = vmatprep.subr.bf16.mxu0 0
    %1280 = vmatpush1.bf16.msra.mxu0 0
    %1281 = vmatprep.subr.bf16.mxu0 0
    %1282 = vmatpush1.bf16.msra.mxu0 %v1263
    %1283 = vmatprep.subr.bf16.mxu0 0
    %1284 = vmatpush1.bf16.msra.mxu0 %v1262
    %1285 = vmatprep.subr.bf16.mxu0 0
    %1286 = vmatpush2.bf16.msra.mxu0 0
    %1287 = vmatprep.subr.bf16.mxu0 0
    %1288 = vmatpush2.bf16.msra.mxu0 0
    %1289 = vmatprep.subr.bf16.mxu0 0
    %1290 = vmatpush2.bf16.msra.mxu0 0
    %1291 = vmatprep.subr.bf16.mxu0 0
    %1292 = vmatpush2.bf16.msra.mxu0 0
    %1293 = vmatprep.subr.bf16.mxu0 0
    %1294 = vmatpush2.bf16.msra.mxu0 0
    %1295 = vmatprep.subr.bf16.mxu0 0
    %1296 = vmatpush2.bf16.msra.mxu0 0
    %1297 = vmatprep.subr.bf16.mxu0 0
    %1298 = vmatpush2.bf16.msra.mxu0 0
    %1299 = vmatprep.subr.bf16.mxu0 0
    %1300 = vmatpush2.bf16.msra.mxu0 0
    %1301 = vmatprep.mubr.bf16.mxu0 0
    %1302 = vmatmul.mubr.bf16.gmra.mxu0 %v1267
    %v1303 = vpop.f32.mrf.mxu0
    %v1304 = vadd.f32 %v1252, %v1303
    %v1305 = vpop.f32.mrf.mxu0
    %v1306 = vpop.f32.mrf.mxu0
    %v1307 = vadd.f32 %v1252, %v1306
    %v1308 = vpop.f32.mrf.mxu0
    %1309 = vdwg.mxu0
    %v1310 = vadd.f32 %v1304, %v66
    %v1311 = vadd.f32 %v1307, %v67
    %v1312 = vld [vmem:[%s9] sm:$0x1]
    %v1313 = vld [vmem:[%s10] sm:$0x1]
    %v1314 = vsel %vm70, %v1310, 0.0
    %1315 = vadd.xlane.f32.xlu0 %v1314
    %v1316 = vpop.xlane.xlu0 %1315
    %v1317 = vsel %vm70, %v1311, 0.0
    %1318 = vadd.xlane.f32.xlu0 %v1317
    %v1319 = vpop.xlane.xlu0 %1318
    %v1320 = vmul.f32 %v1316, %v77
    %v1321 = vmul.f32 %v1319, %v77
    %v1322 = vsub.f32 %v1310, %v1320
    %v1323 = vsub.f32 %v1311, %v1321
    %v1324 = vmul.f32 %v1322, %v1322
    %v1325 = vmul.f32 %v1323, %v1323
    %v1326 = vsel %vm70, %v1324, 0.0
    %1327 = vadd.xlane.f32.xlu0 %v1326
    %v1328 = vpop.xlane.xlu0 %1327
    %v1329 = vsel %vm70, %v1325, 0.0
    %1330 = vadd.xlane.f32.xlu0 %v1329
    %v1331 = vpop.xlane.xlu0 %1330
    %v1332 = vmul.f32 %v1328, %v77
    %v1333 = vmul.f32 %v1331, %v77
    %v1334 = vadd.f32 %v1332, 1e-05
    %v1335 = vadd.f32 %v1333, 1e-05
    %v1336 = vrsqrt.pop %v1334
    %v1337 = vrsqrt.pop %v1335
    %v1338 = vmul.f32 %v1322, %v1336
    %v1339 = vmul.f32 %v1323, %v1337
    %v1341 = vlaneseq
    %v1342 = vshrl.u32 %v1341, 7
    %v1343 = vsub.s32 0, %v1342
    %v1344 = vrot.slane %v1312, %v1343
    %v1346 = vmul.f32 %v1338, %v1344
    %v1347 = vmul.f32 %v1339, %v1344
    %v1349 = vlaneseq
    %v1350 = vshrl.u32 %v1349, 7
    %v1351 = vsub.s32 0, %v1350
    %v1352 = vrot.slane %v1313, %v1351
    %v1354 = vadd.f32 %v1346, %v1352
    %v1355 = vadd.f32 %v1347, %v1352
    %v1356 = vpack.c.bf16 %v1355, %v1354
    %v1357 = vld [vmem:[%s11] sm:$0xf]
    %v1358 = vld [vmem:[%s11 + $0x4] sm:$0xf]
    %v1359 = vld [vmem:[%s11 + $0x8] sm:$0xf]
    %v1360 = vld [vmem:[%s11 + $0xc] sm:$0xf]
    %v1361 = vld [vmem:[%s12] sm:$0x1]
    %v1363 = vlaneseq
    %v1364 = vshrl.u32 %v1363, 7
    %v1365 = vsub.s32 0, %v1364
    %v1366 = vrot.slane %v1361, %v1365
    %v1372 = vunpack.c.l.b16 %v1357
    %v1373 = vunpack.c.l.b16 %v1358
    %v1374 = vunpack.c.l.b16 %v1359
    %v1375 = vunpack.c.l.b16 %v1360
    %v1376 = vpack.c.b16 %v1373, %v1372
    %v1377 = vpack.c.b16 %v1375, %v1374
    %v1381 = vsel %vm70, %v1356, 0
    %1383 = vmatprep.subr.bf16.mxu0 0
    %1384 = vmatpush1.bf16.msra.mxu0 0
    %1385 = vmatprep.subr.bf16.mxu0 0
    %1386 = vmatpush1.bf16.msra.mxu0 0
    %1387 = vmatprep.subr.bf16.mxu0 0
    %1388 = vmatpush1.bf16.msra.mxu0 0
    %1389 = vmatprep.subr.bf16.mxu0 0
    %1390 = vmatpush1.bf16.msra.mxu0 0
    %1391 = vmatprep.subr.bf16.mxu0 0
    %1392 = vmatpush1.bf16.msra.mxu0 0
    %1393 = vmatprep.subr.bf16.mxu0 0
    %1394 = vmatpush1.bf16.msra.mxu0 0
    %1395 = vmatprep.subr.bf16.mxu0 0
    %1396 = vmatpush1.bf16.msra.mxu0 %v1377
    %1397 = vmatprep.subr.bf16.mxu0 0
    %1398 = vmatpush1.bf16.msra.mxu0 %v1376
    %1399 = vmatprep.subr.bf16.mxu0 0
    %1400 = vmatpush2.bf16.msra.mxu0 0
    %1401 = vmatprep.subr.bf16.mxu0 0
    %1402 = vmatpush2.bf16.msra.mxu0 0
    %1403 = vmatprep.subr.bf16.mxu0 0
    %1404 = vmatpush2.bf16.msra.mxu0 0
    %1405 = vmatprep.subr.bf16.mxu0 0
    %1406 = vmatpush2.bf16.msra.mxu0 0
    %1407 = vmatprep.subr.bf16.mxu0 0
    %1408 = vmatpush2.bf16.msra.mxu0 0
    %1409 = vmatprep.subr.bf16.mxu0 0
    %1410 = vmatpush2.bf16.msra.mxu0 0
    %1411 = vmatprep.subr.bf16.mxu0 0
    %1412 = vmatpush2.bf16.msra.mxu0 0
    %1413 = vmatprep.subr.bf16.mxu0 0
    %1414 = vmatpush2.bf16.msra.mxu0 0
    %1415 = vmatprep.mubr.bf16.mxu0 0
    %1416 = vmatmul.mubr.bf16.gmra.mxu0 %v1381
    %v1417 = vpop.f32.mrf.mxu0
    %v1418 = vadd.f32 %v1366, %v1417
    %v1419 = vpop.f32.mrf.mxu0
    %v1420 = vpop.f32.mrf.mxu0
    %v1421 = vadd.f32 %v1366, %v1420
    %v1422 = vpop.f32.mrf.mxu0
    %1423 = vdwg.mxu0
    %v1424 = vmul.f32 %v1418, 0.5
    %v1425 = vmul.f32 %v1421, 0.5
    %v1426 = vmul.f32 %v1418, 0.7978846
    %v1427 = vmul.f32 %v1421, 0.7978846
    %v1428 = vmul.f32 %v1418, 0.044715
    %v1429 = vmul.f32 %v1421, 0.044715
    %v1430 = vmul.f32 %v1428, %v1418
    %v1431 = vmul.f32 %v1429, %v1421
    %v1432 = vadd.f32 %v1430, 1.0
    %v1433 = vadd.f32 %v1431, 1.0
    %v1434 = vmul.f32 %v1426, %v1432
    %v1435 = vmul.f32 %v1427, %v1433
    %v1436 = vtanh.pop %v1434
    %v1437 = vtanh.pop %v1435
    %v1438 = vadd.f32 %v1436, 1.0
    %v1439 = vadd.f32 %v1437, 1.0
    %v1440 = vmul.f32 %v1424, %v1438
    %v1441 = vmul.f32 %v1425, %v1439
    %v1442 = vpack.c.bf16 %v1441, %v1440
    %v1443 = vld [vmem:[%s13] sm:$0xf]
    %v1444 = vld [vmem:[%s13 + $0x4] sm:$0xf]
    %v1445 = vld [vmem:[%s13 + $0x8] sm:$0xf]
    %v1446 = vld [vmem:[%s13 + $0xc] sm:$0xf]
    %v1447 = vld [vmem:[%s13 + $0x10] sm:$0xf]
    %v1448 = vld [vmem:[%s13 + $0x14] sm:$0xf]
    %v1449 = vld [vmem:[%s13 + $0x18] sm:$0xf]
    %v1450 = vld [vmem:[%s13 + $0x1c] sm:$0xf]
    %v1451 = vld [vmem:[%s13 + $0x20] sm:$0xf]
    %v1452 = vld [vmem:[%s13 + $0x24] sm:$0xf]
    %v1453 = vld [vmem:[%s13 + $0x28] sm:$0xf]
    %v1454 = vld [vmem:[%s13 + $0x2c] sm:$0xf]
    %v1455 = vld [vmem:[%s13 + $0x30] sm:$0xf]
    %v1456 = vld [vmem:[%s13 + $0x34] sm:$0xf]
    %v1457 = vld [vmem:[%s13 + $0x38] sm:$0xf]
    %v1458 = vld [vmem:[%s13 + $0x3c] sm:$0xf]
    %v1459 = vld [vmem:[%s14] sm:$0x1]
    %v1461 = vlaneseq
    %v1462 = vshrl.u32 %v1461, 7
    %v1463 = vsub.s32 0, %v1462
    %v1464 = vrot.slane %v1459, %v1463
    %v1482 = vunpack.c.l.b16 %v1443
    %v1483 = vunpack.c.l.b16 %v1444
    %v1484 = vunpack.c.l.b16 %v1445
    %v1485 = vunpack.c.l.b16 %v1446
    %v1486 = vunpack.c.l.b16 %v1447
    %v1487 = vunpack.c.l.b16 %v1448
    %v1488 = vunpack.c.l.b16 %v1449
    %v1489 = vunpack.c.l.b16 %v1450
    %v1490 = vunpack.c.l.b16 %v1451
    %v1491 = vunpack.c.l.b16 %v1452
    %v1492 = vunpack.c.l.b16 %v1453
    %v1493 = vunpack.c.l.b16 %v1454
    %v1494 = vunpack.c.l.b16 %v1455
    %v1495 = vunpack.c.l.b16 %v1456
    %v1496 = vunpack.c.l.b16 %v1457
    %v1497 = vunpack.c.l.b16 %v1458
    %v1498 = vpack.c.b16 %v1483, %v1482
    %v1499 = vpack.c.b16 %v1485, %v1484
    %v1500 = vpack.c.b16 %v1487, %v1486
    %v1501 = vpack.c.b16 %v1489, %v1488
    %v1502 = vpack.c.b16 %v1491, %v1490
    %v1503 = vpack.c.b16 %v1493, %v1492
    %v1504 = vpack.c.b16 %v1495, %v1494
    %v1505 = vpack.c.b16 %v1497, %v1496
    %1514 = vmatprep.subr.bf16.mxu0 0
    %1515 = vmatpush1.bf16.msra.mxu0 %v1505
    %1516 = vmatprep.subr.bf16.mxu0 0
    %1517 = vmatpush1.bf16.msra.mxu0 %v1504
    %1518 = vmatprep.subr.bf16.mxu0 0
    %1519 = vmatpush1.bf16.msra.mxu0 %v1503
    %1520 = vmatprep.subr.bf16.mxu0 0
    %1521 = vmatpush1.bf16.msra.mxu0 %v1502
    %1522 = vmatprep.subr.bf16.mxu0 0
    %1523 = vmatpush1.bf16.msra.mxu0 %v1501
    %1524 = vmatprep.subr.bf16.mxu0 0
    %1525 = vmatpush1.bf16.msra.mxu0 %v1500
    %1526 = vmatprep.subr.bf16.mxu0 0
    %1527 = vmatpush1.bf16.msra.mxu0 %v1499
    %1528 = vmatprep.subr.bf16.mxu0 0
    %1529 = vmatpush1.bf16.msra.mxu0 %v1498
    %1530 = vmatprep.subr.bf16.mxu0 0
    %1531 = vmatpush2.bf16.msra.mxu0 0
    %1532 = vmatprep.subr.bf16.mxu0 0
    %1533 = vmatpush2.bf16.msra.mxu0 0
    %1534 = vmatprep.subr.bf16.mxu0 0
    %1535 = vmatpush2.bf16.msra.mxu0 0
    %1536 = vmatprep.subr.bf16.mxu0 0
    %1537 = vmatpush2.bf16.msra.mxu0 0
    %1538 = vmatprep.subr.bf16.mxu0 0
    %1539 = vmatpush2.bf16.msra.mxu0 0
    %1540 = vmatprep.subr.bf16.mxu0 0
    %1541 = vmatpush2.bf16.msra.mxu0 0
    %1542 = vmatprep.subr.bf16.mxu0 0
    %1543 = vmatpush2.bf16.msra.mxu0 0
    %1544 = vmatprep.subr.bf16.mxu0 0
    %1545 = vmatpush2.bf16.msra.mxu0 0
    %1546 = vmatprep.mubr.bf16.mxu0 0
    %1547 = vmatmul.mubr.bf16.gmra.mxu0 %v1442
    %v1548 = vpop.f32.mrf.mxu0
    %v1549 = vadd.f32 %v1464, %v1548
    %v1550 = vpop.f32.mrf.mxu0
    %v1551 = vpop.f32.mrf.mxu0
    %v1552 = vadd.f32 %v1464, %v1551
    %v1553 = vpop.f32.mrf.mxu0
    %1554 = vdwg.mxu0
    %v1555 = vadd.f32 %v1549, %v1310
    %v1556 = vadd.f32 %v1552, %v1311
    %v1557 = vsel %vm70, %v1555, %v176
    %v1558 = vsel %vm70, %v1556, %v179
    %vm1559 = vcmask 523264
    %v1560 = vsel %vm1559, %v1557, %v176
    %v1561 = vsel %vm1559, %v1558, %v179
    %vm1562 = vcmask 785408
    %v1563 = vsel %vm1562, %v1560, 0.0
    %v1564 = vsel %vm1562, %v1561, 0.0
    %1565 = vst [vmem:[#allocation5] sm:$0xff] %v1563
    %1566 = vst [vmem:[#allocation5 + $0x8] sm:$0xff] %v1564
    // Predicated region
    $region66: #{tpu_custom_call.1} parent=1 // pred_check
      _
    $region67: #{tpu_custom_call.1} parent=1 // pred_check_branch
      %1568 = sbr.rel (0) target = $region69
    $region68: #{tpu_custom_call.1} parent=1 // pred_region
      %s1570 = ssub.s32 256, 256
      %1571 = vsyncadd [#allocation4], %s1570
      %s1572 = sshll.u32 [#allocation5], 4
      %s1573 = int_to_ptr.vmem [resolvable:$true] %s1572
      %1578 = dma.vmem_to_hbm [thread:$0]  %s1573, 256, %s15, [#allocation4], 128, 128, 8
    $region69: #{tpu_custom_call.1} parent=1 // pred_fallthru
      _
    // Predicated region
    $region70: #{tpu_custom_call.1} parent=1 // pred_check
      _
    $region71: #{tpu_custom_call.1} parent=1 // pred_check_branch
      %1580 = sbr.rel (0) target = $region73
    $region72: #{tpu_custom_call.1} parent=1 // pred_region
      %1581 = dma.done [#allocation4], 256
    $region73: #{tpu_custom_call.1} parent=1 // pred_fallthru
      _
    %1582 = vsyncpa [#allocation3], 1
    %1583 = vsyncpa [#allocation4], 1

</llo_original>
